<compile_context>
chip_gen: v7x
topology: tpu7x:2x2x1
jax: 0.10.0
libtpu: 0.0.40
codegen_flags: <defaults>
</compile_context>

<pallas_src>
import jax
import jax.numpy as jnp
from jax import lax
from jax.experimental import pallas as pl
from jax.experimental.pallas import tpu as pltpu


def _q_att_kernel(enc_ref, word_ref, notpad_ref,
                  w_gate_ref, b_gate_ref, watt_ref,
                  feat_ref, att_ref):
    Nt, L = att_ref.shape            # questions per step, tokens per question
    NtL, D2 = enc_ref.shape          # Nt*L tokens, 2*H encoded features
    H = D2 // 2

    # ---- GatedTrans (eval: Dropout = identity); both branches in one MXU push ----
    x = enc_ref[...]                                                    # (Nt*L, 2H)
    yg = (jnp.dot(x, w_gate_ref[...], preferred_element_type=jnp.float32)
          + b_gate_ref[...])                                            # (Nt*L, 2H)
    y = jnp.tanh(yg[:, :H])
    g_pre = yg[:, H:]
    g = jnp.where(g_pre > 0.0, g_pre, 0.01 * g_pre)                     # LeakyReLU(0.01)
    e = (y * g).reshape(Nt, L, H)                                       # (Nt, L, H)

    # ---- att logits: Linear(H,1) on F.normalize(e, p=2), algebraically folded:
    #      normalize(e) . watt == (e . watt) / max(||e||, 1e-12)
    #      (the att bias shifts all logits of a row equally -> cancels in softmax)
    w = watt_ref[...][None]                                             # (1, 1, H)
    s = jnp.sum(e * w, axis=-1)                                         # (Nt, L)
    nrm = jnp.sqrt(jnp.sum(e * e, axis=-1))                             # (Nt, L)
    logits = s / jnp.maximum(nrm, 1e-12)

    # ---- softmax over tokens, zero out padding, renormalize (as in reference) ----
    m = jnp.max(logits, axis=-1, keepdims=True)
    p = jnp.exp(logits - m)
    p = p / jnp.sum(p, axis=-1, keepdims=True)
    p = p * notpad_ref[...]
    att = p / jnp.sum(p, axis=-1, keepdims=True)                        # (Nt, L)
    att_ref[...] = att.astype(att_ref.dtype)

    # ---- feat[n] = sum_l att[n, l] * word[n, l, :]  as ONE rank-2 MXU matmul:
    #      A[n, n*L + l] = att[n, l], zero elsewhere;  feat = A @ word_tokens
    n_idx = lax.broadcasted_iota(jnp.int32, (Nt, NtL), 0)
    m_idx = lax.broadcasted_iota(jnp.int32, (Nt, NtL), 1)
    blockmask = (m_idx >= n_idx * L) & (m_idx < n_idx * L + L)
    a_mat = jnp.where(blockmask, jnp.tile(att, (1, Nt)), 0.0)           # (Nt, Nt*L)
    feat = jnp.dot(a_mat, word_ref[...], preferred_element_type=jnp.float32)
    feat_ref[...] = feat.astype(feat_ref.dtype)                         # (Nt, E)


def q_att_forward(ques_word, ques_word_encoded, ques_not_pad, params, rows_per_step=8):
    """ques_word: (B,R,L,E), ques_word_encoded: (B,R,L,2H), ques_not_pad: (B,R,L)
       -> feat (B,R,E), att (B,R,L)."""
    B, R, L, E = ques_word.shape
    D2 = ques_word_encoded.shape[-1]
    H = D2 // 2
    N = B * R

    # questions per grid step: multiple of 8 that divides N (else take all of N)
    Nt = rows_per_step if (N % rows_per_step == 0 and rows_per_step % 8 == 0) else N
    grid = (N // Nt,)

    # host-side flatten: token features stay in lanes, tokens/rows in sublanes
    enc2 = ques_word_encoded.reshape(N * L, D2).astype(jnp.float32)
    word2 = ques_word.reshape(N * L, E).astype(jnp.float32)
    notpad = ques_not_pad.reshape(N, L).astype(jnp.float32)

    # pack params: [Wy | Wg] one weight, [by | bg] one bias, watt row; batt folded out
    w_gate = jnp.concatenate([params["wy"], params["wg"]], axis=1)      # (2H, 2H)
    b_gate = jnp.concatenate([params["by"], params["bg"]], axis=1)      # (1, 2H)
    watt = params["watt"]                                               # (1, H)

    feat, att = pl.pallas_call(
        _q_att_kernel,
        out_shape=(jax.ShapeDtypeStruct((N, E), jnp.float32),
                   jax.ShapeDtypeStruct((N, L), jnp.float32)),
        grid_spec=pltpu.PrefetchScalarGridSpec(
            num_scalar_prefetch=0,
            grid=grid,
            in_specs=[
                pl.BlockSpec((Nt * L, D2), lambda b: (b, 0)),   # encoded tokens
                pl.BlockSpec((Nt * L, E), lambda b: (b, 0)),    # word embeddings
                pl.BlockSpec((Nt, L), lambda b: (b, 0)),        # not-pad mask
                pl.BlockSpec((D2, D2), lambda b: (0, 0)),       # [Wy | Wg]
                pl.BlockSpec((1, D2), lambda b: (0, 0)),        # [by | bg]
                pl.BlockSpec((1, H), lambda b: (0, 0)),         # watt
            ],
            out_specs=[
                pl.BlockSpec((Nt, E), lambda b: (b, 0)),        # feat
                pl.BlockSpec((Nt, L), lambda b: (b, 0)),        # att
            ],
        ),
        compiler_params=pltpu.CompilerParams(
            dimension_semantics=("parallel",)),
    )(enc2, word2, notpad, w_gate, b_gate, watt)

    return feat.reshape(B, R, E), att.reshape(B, R, L)


def _kaiming_uniform(key, out_dim, in_dim):
    # nn.init.kaiming_uniform_ defaults: gain=sqrt(2) -> bound = sqrt(6 / fan_in)
    bound = (6.0 / in_dim) ** 0.5
    return jax.random.uniform(key, (out_dim, in_dim), jnp.float32, -bound, bound)


def make_params(key, hidden):
    H, D2 = hidden, 2 * hidden
    k1, k2, k3 = jax.random.split(key, 3)
    return dict(
        wy=_kaiming_uniform(k1, H, D2).T,     # (2H, H), pre-transposed for x @ W
        by=jnp.zeros((1, H), jnp.float32),
        wg=_kaiming_uniform(k2, H, D2).T,     # (2H, H)
        bg=jnp.zeros((1, H), jnp.float32),
        watt=_kaiming_uniform(k3, 1, H),      # att Linear(H -> 1), torch layout (1, H)
        batt=jnp.zeros((1, 1), jnp.float32),
    )


def q_att_reference(ques_word, ques_word_encoded, ques_not_pad, params):
    """Pure-JAX mirror of the PyTorch forward (eval mode)."""
    x = ques_word_encoded
    y = jnp.tanh(x @ params["wy"] + params["by"])
    g_pre = x @ params["wg"] + params["bg"]
    g = jnp.where(g_pre > 0, g_pre, 0.01 * g_pre)
    e = y * g
    n = e / jnp.maximum(jnp.sqrt(jnp.sum(e * e, axis=-1, keepdims=True)), 1e-12)
    logit = jnp.sum(n * params["watt"], axis=-1) + params["batt"][0, 0]
    a = jax.nn.softmax(logit, axis=-1)
    a = a * ques_not_pad
    a = a / jnp.sum(a, axis=-1, keepdims=True)
    feat = jnp.sum(a[..., None] * ques_word, axis=-2)
    return feat, a


if __name__ == "__main__":
    B, R, L, H, E = 2, 8, 8, 32, 64   # batch, rounds, max question len, lstm hidden, word dim
    key = jax.random.PRNGKey(0)
    k_w, k_e, k_l, k_p = jax.random.split(key, 4)
    ques_word = jax.random.normal(k_w, (B, R, L, E), jnp.float32)
    ques_word_encoded = jax.random.normal(k_e, (B, R, L, 2 * H), jnp.float32)
    lengths = jax.random.randint(k_l, (B, R), 1, L + 1)
    ques_not_pad = (jnp.arange(L)[None, None, :] < lengths[:, :, None]).astype(jnp.float32)
    params = make_params(k_p, H)

    feat, att = q_att_forward(ques_word, ques_word_encoded, ques_not_pad, params)
    feat, att = jax.block_until_ready((feat, att))

    feat_r, att_r = q_att_reference(ques_word, ques_word_encoded, ques_not_pad, params)

    assert feat.shape == (B, R, E) and att.shape == (B, R, L)
    assert bool(jnp.allclose(att, att_r, rtol=1e-3, atol=1e-4))
    assert bool(jnp.allclose(feat, feat_r, rtol=1e-3, atol=1e-3))
    # structural checks: attention rows sum to 1, padded tokens get exactly zero weight
    assert bool(jnp.all(jnp.abs(jnp.sum(att, axis=-1) - 1.0) < 1e-5))
    assert bool(jnp.all(jnp.where(ques_not_pad == 0.0, att, 0.0) == 0.0))

    print("KERNEL_OK")
</pallas_src>

<mosaic_0001>
module attributes {stable_mosaic.version = 11 : i64} {
  func.func @_q_att_kernel(%arg0: i32, %arg1: memref<64x64xf32, #tpu.memory_space<vmem>>, %arg2: memref<64x64xf32, #tpu.memory_space<vmem>>, %arg3: memref<8x8xf32, #tpu.memory_space<vmem>>, %arg4: memref<64x64xf32, #tpu.memory_space<vmem>>, %arg5: memref<1x64xf32, #tpu.memory_space<vmem>>, %arg6: memref<1x32xf32, #tpu.memory_space<vmem>>, %arg7: memref<8x64xf32, #tpu.memory_space<vmem>>, %arg8: memref<8x8xf32, #tpu.memory_space<vmem>>) attributes {dimension_semantics = [#tpu.dimension_semantics<parallel>], iteration_bounds = array<i64: 2>, scalar_prefetch = 0 : i64, scratch_operands = 0 : i64, tpu.core_type = #tpu.core_type<tc>, window_params = [{transform_indices = @transform_0, window_bounds = array<i64: 64, 64>}, {transform_indices = @transform_1, window_bounds = array<i64: 64, 64>}, {transform_indices = @transform_2, window_bounds = array<i64: 8, 8>}, {pipeline_mode = #tpu.pipeline_mode<synchronous>, transform_indices = @transform_3, window_bounds = array<i64: 64, 64>}, {pipeline_mode = #tpu.pipeline_mode<synchronous>, transform_indices = @transform_4, window_bounds = array<i64: 1, 64>}, {pipeline_mode = #tpu.pipeline_mode<synchronous>, transform_indices = @transform_5, window_bounds = array<i64: 1, 32>}, {transform_indices = @transform_6, window_bounds = array<i64: 8, 64>}, {transform_indices = @transform_7, window_bounds = array<i64: 8, 8>}]} {
    %c0 = arith.constant 0 : index
    %c0_0 = arith.constant 0 : index
    %0 = vector.load %arg1[%c0, %c0_0] : memref<64x64xf32, #tpu.memory_space<vmem>>, vector<64x64xf32>
    %c0_1 = arith.constant 0 : index
    %c0_2 = arith.constant 0 : index
    %1 = vector.load %arg4[%c0_1, %c0_2] : memref<64x64xf32, #tpu.memory_space<vmem>>, vector<64x64xf32>
    %cst = arith.constant dense<0.000000e+00> : vector<64x64xf32>
    %2 = tpu.matmul %0, %1, %cst {dimension_numbers = #tpu.dot_dimension_numbers<[1], [0], [0], [1], [0, 0, 1, 1], [], []>} : vector<64x64xf32>, vector<64x64xf32>, vector<64x64xf32> -> vector<64x64xf32>
    %c0_3 = arith.constant 0 : index
    %c0_4 = arith.constant 0 : index
    %3 = vector.load %arg5[%c0_3, %c0_4] : memref<1x64xf32, #tpu.memory_space<vmem>>, vector<1x64xf32>
    %4 = vector.broadcast %3 : vector<1x64xf32> to vector<64x64xf32>
    %5 = arith.addf %2, %4 : vector<64x64xf32>
    %6 = vector.extract_strided_slice %5 {offsets = [0, 0], sizes = [64, 32], strides = [1, 1]} : vector<64x64xf32> to vector<64x32xf32>
    %7 = math.tanh %6 : vector<64x32xf32>
    %8 = vector.extract_strided_slice %5 {offsets = [0, 32], sizes = [64, 32], strides = [1, 1]} : vector<64x64xf32> to vector<64x32xf32>
    %cst_5 = arith.constant 0.000000e+00 : f32
    %9 = vector.broadcast %cst_5 : f32 to vector<64x32xf32>
    %10 = arith.cmpf ogt, %8, %9 : vector<64x32xf32>
    %cst_6 = arith.constant 0.00999999977 : f32
    %11 = vector.broadcast %cst_6 : f32 to vector<64x32xf32>
    %12 = arith.mulf %11, %8 : vector<64x32xf32>
    %13 = arith.select %10, %8, %12 : vector<64x32xi1>, vector<64x32xf32>
    %14 = arith.mulf %7, %13 : vector<64x32xf32>
    %15 = vector.shape_cast %14 : vector<64x32xf32> to vector<8x8x32xf32>
    %c0_7 = arith.constant 0 : index
    %c0_8 = arith.constant 0 : index
    %16 = vector.load %arg6[%c0_7, %c0_8] : memref<1x32xf32, #tpu.memory_space<vmem>>, vector<1x32xf32>
    %17 = vector.shape_cast %16 : vector<1x32xf32> to vector<1x1x32xf32>
    %18 = vector.broadcast %17 : vector<1x1x32xf32> to vector<8x8x32xf32>
    %19 = arith.mulf %15, %18 : vector<8x8x32xf32>
    %cst_9 = arith.constant dense<0.000000e+00> : vector<8x8xf32>
    %20 = vector.multi_reduction <add>, %19, %cst_9 [2] : vector<8x8x32xf32> to vector<8x8xf32>
    %21 = arith.mulf %15, %15 : vector<8x8x32xf32>
    %cst_10 = arith.constant dense<0.000000e+00> : vector<8x8xf32>
    %22 = vector.multi_reduction <add>, %21, %cst_10 [2] : vector<8x8x32xf32> to vector<8x8xf32>
    %23 = math.sqrt %22 : vector<8x8xf32>
    %cst_11 = arith.constant 9.99999996E-13 : f32
    %24 = vector.broadcast %cst_11 : f32 to vector<8x8xf32>
    %25 = arith.maximumf %23, %24 : vector<8x8xf32>
    %26 = arith.divf %20, %25 : vector<8x8xf32>
    %cst_12 = arith.constant dense<0xFF800000> : vector<8xf32>
    %27 = vector.multi_reduction <maximumf>, %26, %cst_12 [1] : vector<8x8xf32> to vector<8xf32>
    %28 = vector.shape_cast %27 : vector<8xf32> to vector<8x1xf32>
    %29 = vector.broadcast %28 : vector<8x1xf32> to vector<8x8xf32>
    %30 = arith.subf %26, %29 : vector<8x8xf32>
    %31 = math.exp %30 : vector<8x8xf32>
    %cst_13 = arith.constant dense<0.000000e+00> : vector<8xf32>
    %32 = vector.multi_reduction <add>, %31, %cst_13 [1] : vector<8x8xf32> to vector<8xf32>
    %33 = vector.shape_cast %32 : vector<8xf32> to vector<8x1xf32>
    %34 = vector.broadcast %33 : vector<8x1xf32> to vector<8x8xf32>
    %35 = arith.divf %31, %34 : vector<8x8xf32>
    %c0_14 = arith.constant 0 : index
    %c0_15 = arith.constant 0 : index
    %36 = vector.load %arg3[%c0_14, %c0_15] : memref<8x8xf32, #tpu.memory_space<vmem>>, vector<8x8xf32>
    %37 = arith.mulf %35, %36 : vector<8x8xf32>
    %cst_16 = arith.constant dense<0.000000e+00> : vector<8xf32>
    %38 = vector.multi_reduction <add>, %37, %cst_16 [1] : vector<8x8xf32> to vector<8xf32>
    %39 = vector.shape_cast %38 : vector<8xf32> to vector<8x1xf32>
    %40 = vector.broadcast %39 : vector<8x1xf32> to vector<8x8xf32>
    %41 = arith.divf %37, %40 : vector<8x8xf32>
    %c0_17 = arith.constant 0 : index
    %c0_18 = arith.constant 0 : index
    %42 = vector.load %arg8[%c0_17, %c0_18] : memref<8x8xf32, #tpu.memory_space<vmem>>, vector<8x8xf32>
    tpu.vector_store %arg8[%c0_17, %c0_18], %41 {strides = array<i32>} : memref<8x8xf32, #tpu.memory_space<vmem>>, vector<8x8xf32>,
    %43 = tpu.iota {dimensions = array<i32: 0>} : vector<8x64xi32>
    %44 = tpu.iota {dimensions = array<i32: 1>} : vector<8x64xi32>
    %c8_i32 = arith.constant 8 : i32
    %45 = vector.broadcast %c8_i32 : i32 to vector<8x64xi32>
    %46 = arith.muli %43, %45 : vector<8x64xi32>
    %47 = arith.cmpi sge, %44, %46 : vector<8x64xi32>
    %c8_i32_19 = arith.constant 8 : i32
    %48 = vector.broadcast %c8_i32_19 : i32 to vector<8x64xi32>
    %49 = arith.muli %43, %48 : vector<8x64xi32>
    %c8_i32_20 = arith.constant 8 : i32
    %50 = vector.broadcast %c8_i32_20 : i32 to vector<8x64xi32>
    %51 = arith.addi %49, %50 : vector<8x64xi32>
    %52 = arith.cmpi slt, %44, %51 : vector<8x64xi32>
    %53 = arith.andi %47, %52 : vector<8x64xi1>
    %54 = tpu.concatenate %41, %41, %41, %41, %41, %41, %41, %41 in 1 : vector<8x8xf32>, vector<8x8xf32>, vector<8x8xf32>, vector<8x8xf32>, vector<8x8xf32>, vector<8x8xf32>, vector<8x8xf32>, vector<8x8xf32> -> vector<8x64xf32>
    %cst_21 = arith.constant 0.000000e+00 : f32
    %55 = vector.broadcast %cst_21 : f32 to vector<8x64xf32>
    %56 = arith.select %53, %54, %55 : vector<8x64xi1>, vector<8x64xf32>
    %c0_22 = arith.constant 0 : index
    %c0_23 = arith.constant 0 : index
    %57 = vector.load %arg2[%c0_22, %c0_23] : memref<64x64xf32, #tpu.memory_space<vmem>>, vector<64x64xf32>
    %cst_24 = arith.constant dense<0.000000e+00> : vector<8x64xf32>
    %58 = tpu.matmul %56, %57, %cst_24 {dimension_numbers = #tpu.dot_dimension_numbers<[1], [0], [0], [1], [0, 0, 1, 1], [], []>} : vector<8x64xf32>, vector<64x64xf32>, vector<8x64xf32> -> vector<8x64xf32>
    %c0_25 = arith.constant 0 : index
    %c0_26 = arith.constant 0 : index
    %59 = vector.load %arg7[%c0_25, %c0_26] : memref<8x64xf32, #tpu.memory_space<vmem>>, vector<8x64xf32>
    tpu.vector_store %arg7[%c0_25, %c0_26], %58 {strides = array<i32>} : memref<8x64xf32, #tpu.memory_space<vmem>>, vector<8x64xf32>,
    return
  }
  func.func @transform_0(%arg0: i32) -> (i32, i32) {
    %c0_i32 = arith.constant 0 : i32
    %c0_i32_0 = arith.constant 0 : i32
    return %arg0, %c0_i32 : i32, i32
  }
  func.func @transform_1(%arg0: i32) -> (i32, i32) {
    %c0_i32 = arith.constant 0 : i32
    %c0_i32_0 = arith.constant 0 : i32
    return %arg0, %c0_i32 : i32, i32
  }
  func.func @transform_2(%arg0: i32) -> (i32, i32) {
    %c0_i32 = arith.constant 0 : i32
    %c0_i32_0 = arith.constant 0 : i32
    return %arg0, %c0_i32 : i32, i32
  }
  func.func @transform_3(%arg0: i32) -> (i32, i32) {
    %c0_i32 = arith.constant 0 : i32
    %c0_i32_0 = arith.constant 0 : i32
    %c0_i32_1 = arith.constant 0 : i32
    return %c0_i32, %c0_i32_0 : i32, i32
  }
  func.func @transform_4(%arg0: i32) -> (i32, i32) {
    %c0_i32 = arith.constant 0 : i32
    %c0_i32_0 = arith.constant 0 : i32
    %c0_i32_1 = arith.constant 0 : i32
    return %c0_i32, %c0_i32_0 : i32, i32
  }
  func.func @transform_5(%arg0: i32) -> (i32, i32) {
    %c0_i32 = arith.constant 0 : i32
    %c0_i32_0 = arith.constant 0 : i32
    %c0_i32_1 = arith.constant 0 : i32
    return %c0_i32, %c0_i32_0 : i32, i32
  }
  func.func @transform_6(%arg0: i32) -> (i32, i32) {
    %c0_i32 = arith.constant 0 : i32
    %c0_i32_0 = arith.constant 0 : i32
    return %arg0, %c0_i32 : i32, i32
  }
  func.func @transform_7(%arg0: i32) -> (i32, i32) {
    %c0_i32 = arith.constant 0 : i32
    %c0_i32_0 = arith.constant 0 : i32
    return %arg0, %c0_i32 : i32, i32
  }
}

</mosaic_0001>

<llo_original>
// kernel: tpu_custom_call.1
$region0: #{tpu_custom_call.1}
  #allocation0 [shape = 'u32[]', space=smem, size = 0x4, offset = 0x4, fixed_abs, tag = 'smem constant byte address 0x4 - core index']
  #allocation1 [shape = 'u32[144,128]{1,0:T(1,128)}', space=vmem, size = 0x12000, scoped, tag = 'internal scratch']
  %s0 = inlined_call_operand.vmem [shape: f32[128,64], index: 0, kind: input, shape index: {}]
  %s1 = inlined_call_operand.vmem [shape: f32[128,64], index: 1, kind: input, shape index: {}]
  %s2 = inlined_call_operand.vmem [shape: f32[16,8], index: 2, kind: input, shape index: {}]
  %s3 = inlined_call_operand.vmem [shape: f32[64,64], index: 3, kind: input, shape index: {}]
  %s4 = inlined_call_operand.vmem [shape: f32[1,64], index: 4, kind: input, shape index: {}]
  %s5 = inlined_call_operand.vmem [shape: f32[1,32], index: 5, kind: input, shape index: {}]
  %s6 = inlined_call_operand.hbm [shape: f32[16,64], index: 6, kind: output, shape index: {0}]
  %s7 = inlined_call_operand.vmem [shape: f32[16,8], index: 7, kind: output, shape index: {1}]
  %8 = xla_tuple %s6, %s7
  %s9 = sld [smem:[#allocation0]]
  $region65: #{tpu_custom_call.1} parent=0
    _
  %s11 = ssub.s32 1, %s9
  %s12 = scalar_select 0, %s11, %s9
  $region1: #{tpu_custom_call.1} parent=0
    #allocation2 [shape = 'u8[8192]{0}', space=vmem, size = 0x2000, scoped, tag = 'output window, operand 0']
    #allocation3 [shape = 's32[2]{0}', space=sflag, size = 0x8, scoped, tag = 'scoped memory for tpu_custom_call.1']
    %13 = vsyncpa [#allocation3], 0
    %s14 = scalar_lea.sflag [#allocation3], 1
    %15 = vsyncpa %s14, 0
    loop: start=0, step=1, limit=4
    $region2: #{tpu_custom_call.1} parent=1 // loop_pre_header
      _
    $region3: #{tpu_custom_call.1} parent=1 // loop_header
      %s17 = sphi 0, %s21
      %p18 = scmp.ge.s32.totalorder %s17, 4
      %s27 = sphi 0, %s29
      %s30 = sphi 0, %s27
      %s31 = sphi 0, %s30
      %s47 = sphi 0, %s31
      %s53 = sphi 0, %s55
      %s56 = sphi 0, %s53
      %s57 = sphi 0, %s56
      %s73 = sphi 0, %s57
      %s79 = sphi 0, %s81
      %s82 = sphi 0, %s79
      %s83 = sphi 0, %s82
      %s99 = sphi 0, %s83
      %s103 = sphi 0, %s103
      %s105 = sphi 0, %s103
      %s106 = sphi 0, %s105
      %s120 = sphi 0, %s106
      %s124 = sphi 0, %s124
      %s126 = sphi 0, %s124
      %s127 = sphi 0, %s126
      %s141 = sphi 0, %s127
      %s145 = sphi 0, %s145
      %s147 = sphi 0, %s145
      %s148 = sphi 0, %s147
      %s162 = sphi 0, %s148
      %s168 = sphi 0, %s170
      %s171 = sphi 0, %s168
      %s172 = sphi 0, %s171
      %s188 = sphi 0, %s172
      %s194 = sphi 0, %s196
      %s197 = sphi 0, %s194
      %s198 = sphi 0, %s197
      %s214 = sphi 0, %s198
    $region4: #{tpu_custom_call.1} parent=1 // loop_header_branch
      %20 = sbr.rel (%p18) target = $region8
    $region5: #{tpu_custom_call.1} parent=1 // loop_body
      %s22 = ssub.s32 %s17, 1
      %s23 = ssub.s32 %s17, 2
      %s24 = sadd.s32 %s17, 1
      %s25 = ssub.s32 %s17, %s24
      %p26 = scmp.eq.s32.totalorder %s25, 0
      %s28 = sadd.s32 %s27, 1
      %s29 = scalar_select %p26, %s27, %s28
      %p32 = pneg %p26
      %p33 = scmp.eq.s32.totalorder %s17, 1
      %p34 = por %p32, %p33
      %p35 = scmp.ne.s32.totalorder %s27, %s30
      %p36 = scmp.eq.s32.totalorder %s17, 0
      %p37 = por %p35, %p36
      %p38 = scmp.ne.s32.totalorder %s27, %s30
      %p39 = scmp.eq.s32.totalorder %s22, 1
      %p40 = por %p38, %p39
      %p41 = scmp.ne.s32.totalorder %s30, %s31
      %p42 = scmp.eq.s32.totalorder %s22, 0
      %p43 = por %p41, %p42
      %p44 = scmp.ne.s32.totalorder %s30, %s31
      %p45 = scmp.eq.s32.totalorder %s23, 1
      %p46 = por %p44, %p45
      %p48 = scmp.ne.s32.totalorder %s31, %s47
      %p49 = scmp.eq.s32.totalorder %s23, 0
      %p50 = por %p48, %p49
      %s51 = ssub.s32 %s17, %s24
      %p52 = scmp.eq.s32.totalorder %s51, 0
      %s54 = sadd.s32 %s53, 1
      %s55 = scalar_select %p52, %s53, %s54
      %p58 = pneg %p52
      %p59 = scmp.eq.s32.totalorder %s17, 1
      %p60 = por %p58, %p59
      %p61 = scmp.ne.s32.totalorder %s53, %s56
      %p62 = scmp.eq.s32.totalorder %s17, 0
      %p63 = por %p61, %p62
      %p64 = scmp.ne.s32.totalorder %s53, %s56
      %p65 = scmp.eq.s32.totalorder %s22, 1
      %p66 = por %p64, %p65
      %p67 = scmp.ne.s32.totalorder %s56, %s57
      %p68 = scmp.eq.s32.totalorder %s22, 0
      %p69 = por %p67, %p68
      %p70 = scmp.ne.s32.totalorder %s56, %s57
      %p71 = scmp.eq.s32.totalorder %s23, 1
      %p72 = por %p70, %p71
      %p74 = scmp.ne.s32.totalorder %s57, %s73
      %p75 = scmp.eq.s32.totalorder %s23, 0
      %p76 = por %p74, %p75
      %s77 = ssub.s32 %s17, %s24
      %p78 = scmp.eq.s32.totalorder %s77, 0
      %s80 = sadd.s32 %s79, 1
      %s81 = scalar_select %p78, %s79, %s80
      %p84 = pneg %p78
      %p85 = scmp.eq.s32.totalorder %s17, 1
      %p86 = por %p84, %p85
      %p87 = scmp.ne.s32.totalorder %s79, %s82
      %p88 = scmp.eq.s32.totalorder %s17, 0
      %p89 = por %p87, %p88
      %p90 = scmp.ne.s32.totalorder %s79, %s82
      %p91 = scmp.eq.s32.totalorder %s22, 1
      %p92 = por %p90, %p91
      %p93 = scmp.ne.s32.totalorder %s82, %s83
      %p94 = scmp.eq.s32.totalorder %s22, 0
      %p95 = por %p93, %p94
      %p96 = scmp.ne.s32.totalorder %s82, %s83
      %p97 = scmp.eq.s32.totalorder %s23, 1
      %p98 = por %p96, %p97
      %p100 = scmp.ne.s32.totalorder %s83, %s99
      %p101 = scmp.eq.s32.totalorder %s23, 0
      %p102 = por %p100, %p101
      %s104 = sadd.s32 %s103, 1
      %p107 = scmp.eq.s32.totalorder %s17, 1
      %p108 = scmp.ne.s32.totalorder %s103, %s105
      %p109 = scmp.eq.s32.totalorder %s17, 0
      %p110 = por %p108, %p109
      %p111 = scmp.ne.s32.totalorder %s103, %s105
      %p112 = scmp.eq.s32.totalorder %s22, 1
      %p113 = por %p111, %p112
      %p114 = scmp.ne.s32.totalorder %s105, %s106
      %p115 = scmp.eq.s32.totalorder %s22, 0
      %p116 = por %p114, %p115
      %p117 = scmp.ne.s32.totalorder %s105, %s106
      %p118 = scmp.eq.s32.totalorder %s23, 1
      %p119 = por %p117, %p118
      %p121 = scmp.ne.s32.totalorder %s106, %s120
      %p122 = scmp.eq.s32.totalorder %s23, 0
      %p123 = por %p121, %p122
      %s125 = sadd.s32 %s124, 1
      %p128 = scmp.eq.s32.totalorder %s17, 1
      %p129 = scmp.ne.s32.totalorder %s124, %s126
      %p130 = scmp.eq.s32.totalorder %s17, 0
      %p131 = por %p129, %p130
      %p132 = scmp.ne.s32.totalorder %s124, %s126
      %p133 = scmp.eq.s32.totalorder %s22, 1
      %p134 = por %p132, %p133
      %p135 = scmp.ne.s32.totalorder %s126, %s127
      %p136 = scmp.eq.s32.totalorder %s22, 0
      %p137 = por %p135, %p136
      %p138 = scmp.ne.s32.totalorder %s126, %s127
      %p139 = scmp.eq.s32.totalorder %s23, 1
      %p140 = por %p138, %p139
      %p142 = scmp.ne.s32.totalorder %s127, %s141
      %p143 = scmp.eq.s32.totalorder %s23, 0
      %p144 = por %p142, %p143
      %s146 = sadd.s32 %s145, 1
      %p149 = scmp.eq.s32.totalorder %s17, 1
      %p150 = scmp.ne.s32.totalorder %s145, %s147
      %p151 = scmp.eq.s32.totalorder %s17, 0
      %p152 = por %p150, %p151
      %p153 = scmp.ne.s32.totalorder %s145, %s147
      %p154 = scmp.eq.s32.totalorder %s22, 1
      %p155 = por %p153, %p154
      %p156 = scmp.ne.s32.totalorder %s147, %s148
      %p157 = scmp.eq.s32.totalorder %s22, 0
      %p158 = por %p156, %p157
      %p159 = scmp.ne.s32.totalorder %s147, %s148
      %p160 = scmp.eq.s32.totalorder %s23, 1
      %p161 = por %p159, %p160
      %p163 = scmp.ne.s32.totalorder %s148, %s162
      %p164 = scmp.eq.s32.totalorder %s23, 0
      %p165 = por %p163, %p164
      %s166 = ssub.s32 %s17, %s24
      %p167 = scmp.eq.s32.totalorder %s166, 0
      %s169 = sadd.s32 %s168, 1
      %s170 = scalar_select %p167, %s168, %s169
      %p173 = pneg %p167
      %p174 = scmp.eq.s32.totalorder %s17, 1
      %p175 = por %p173, %p174
      %p176 = scmp.ne.s32.totalorder %s168, %s171
      %p177 = scmp.eq.s32.totalorder %s17, 0
      %p178 = por %p176, %p177
      %p179 = scmp.ne.s32.totalorder %s168, %s171
      %p180 = scmp.eq.s32.totalorder %s22, 1
      %p181 = por %p179, %p180
      %p182 = scmp.ne.s32.totalorder %s171, %s172
      %p183 = scmp.eq.s32.totalorder %s22, 0
      %p184 = por %p182, %p183
      %p185 = scmp.ne.s32.totalorder %s171, %s172
      %p186 = scmp.eq.s32.totalorder %s23, 1
      %p187 = por %p185, %p186
      %p189 = scmp.ne.s32.totalorder %s172, %s188
      %p190 = scmp.eq.s32.totalorder %s23, 0
      %p191 = por %p189, %p190
      %s192 = ssub.s32 %s17, %s24
      %p193 = scmp.eq.s32.totalorder %s192, 0
      %s195 = sadd.s32 %s194, 1
      %s196 = scalar_select %p193, %s194, %s195
      %p199 = pneg %p193
      %p200 = scmp.eq.s32.totalorder %s17, 1
      %p201 = por %p199, %p200
      %p202 = scmp.ne.s32.totalorder %s194, %s197
      %p203 = scmp.eq.s32.totalorder %s17, 0
      %p204 = por %p202, %p203
      %p205 = scmp.ne.s32.totalorder %s194, %s197
      %p206 = scmp.eq.s32.totalorder %s22, 1
      %p207 = por %p205, %p206
      %p208 = scmp.ne.s32.totalorder %s197, %s198
      %p209 = scmp.eq.s32.totalorder %s22, 0
      %p210 = por %p208, %p209
      %p211 = scmp.ne.s32.totalorder %s197, %s198
      %p212 = scmp.eq.s32.totalorder %s23, 1
      %p213 = por %p211, %p212
      %p215 = scmp.ne.s32.totalorder %s198, %s214
      %p216 = scmp.eq.s32.totalorder %s23, 0
      %p217 = por %p215, %p216
      %p218 = scmp.le.s32.totalorder 1, %s17
      %p219 = scmp.lt.s32.totalorder %s17, 3
      %p220 = pnand %p218, %p219
      %p221 = pneg %p220
      // Predicated region
      $region9: #{tpu_custom_call.1} parent=5 // pred_check
        _
      $region10: #{tpu_custom_call.1} parent=5 // pred_check_branch
        %223 = sbr.rel (%p220) target = $region12
      $region11: #{tpu_custom_call.1} parent=5 // pred_region
        %s224 = ssub.s32 %s17, 1
        // Predicated region
        $region13: #{tpu_custom_call.1} parent=11 // pred_check
          %p225 = pneg %p116
        $region14: #{tpu_custom_call.1} parent=11 // pred_check_branch
          %227 = sbr.rel (%p225) target = $region16
        $region15: #{tpu_custom_call.1} parent=11 // pred_region
          _
        $region16: #{tpu_custom_call.1} parent=11 // pred_fallthru
          _
        // Predicated region
        $region17: #{tpu_custom_call.1} parent=11 // pred_check
          %p228 = pneg %p137
        $region18: #{tpu_custom_call.1} parent=11 // pred_check_branch
          %230 = sbr.rel (%p228) target = $region20
        $region19: #{tpu_custom_call.1} parent=11 // pred_region
          _
        $region20: #{tpu_custom_call.1} parent=11 // pred_fallthru
          _
        // Predicated region
        $region21: #{tpu_custom_call.1} parent=11 // pred_check
          %p231 = pneg %p158
        $region22: #{tpu_custom_call.1} parent=11 // pred_check_branch
          %233 = sbr.rel (%p231) target = $region24
        $region23: #{tpu_custom_call.1} parent=11 // pred_region
          _
        $region24: #{tpu_custom_call.1} parent=11 // pred_fallthru
          _
      $region12: #{tpu_custom_call.1} parent=5 // pred_fallthru
        _
      %p234 = scmp.lt.s32.totalorder %s17, 2
      // Predicated region
      $region25: #{tpu_custom_call.1} parent=5 // pred_check
        %p235 = pneg %p234
      $region26: #{tpu_custom_call.1} parent=5 // pred_check_branch
        %237 = sbr.rel (%p235) target = $region28
      $region27: #{tpu_custom_call.1} parent=5 // pred_region
        // Predicated region
        $region29: #{tpu_custom_call.1} parent=27 // pred_check
          %p238 = pneg %p37
        $region30: #{tpu_custom_call.1} parent=27 // pred_check_branch
          %240 = sbr.rel (%p238) target = $region32
        $region31: #{tpu_custom_call.1} parent=27 // pred_region
          %s241 = smul.u32 8, %s17
          %p242 = scmp.lt.s32.totalorder %s241, 15
          %s243 = scalar_select %p242, %s241, 15
          %s244 = smul.addr %s243, 8
          %s245 = scalar_lea.vmem %s0, %s244
          %s246 = smul.u32 8, %s17
        $region32: #{tpu_custom_call.1} parent=27 // pred_fallthru
          _
        // Predicated region
        $region33: #{tpu_custom_call.1} parent=27 // pred_check
          %p247 = pneg %p63
        $region34: #{tpu_custom_call.1} parent=27 // pred_check_branch
          %249 = sbr.rel (%p247) target = $region36
        $region35: #{tpu_custom_call.1} parent=27 // pred_region
          %s250 = smul.u32 8, %s17
          %p251 = scmp.lt.s32.totalorder %s250, 15
          %s252 = scalar_select %p251, %s250, 15
          %s253 = smul.addr %s252, 8
          %s254 = scalar_lea.vmem %s1, %s253
          %s255 = smul.u32 8, %s17
        $region36: #{tpu_custom_call.1} parent=27 // pred_fallthru
          _
        // Predicated region
        $region37: #{tpu_custom_call.1} parent=27 // pred_check
          %p256 = pneg %p89
        $region38: #{tpu_custom_call.1} parent=27 // pred_check_branch
          %258 = sbr.rel (%p256) target = $region40
        $region39: #{tpu_custom_call.1} parent=27 // pred_region
          %p259 = scmp.lt.s32.totalorder %s17, 1
          %s260 = scalar_select %p259, %s17, 1
          %s261 = smul.addr %s260, 8
          %s262 = scalar_lea.vmem %s2, %s261
        $region40: #{tpu_custom_call.1} parent=27 // pred_fallthru
          _
      $region28: #{tpu_custom_call.1} parent=5 // pred_fallthru
        _
      %p263 = scmp.le.s32.totalorder 1, %s17
      %p264 = scmp.lt.s32.totalorder %s17, 3
      %p265 = pnand %p263, %p264
      %p266 = pneg %p265
      // Predicated region
      $region41: #{tpu_custom_call.1} parent=5 // pred_check
        _
      $region42: #{tpu_custom_call.1} parent=5 // pred_check_branch
        %268 = sbr.rel (%p265) target = $region44
      $region43: #{tpu_custom_call.1} parent=5 // pred_region
        %s269 = ssub.s32 %s17, 1
        %s270 = smul.u32 8, %s22
        %p271 = scmp.lt.s32.totalorder %s270, 15
        %s272 = scalar_select %p271, %s270, 15
        %s273 = smul.addr %s272, 8
        %s274 = scalar_lea.vmem %s0, %s273
        %p275 = pneg %p43
        %p276 = pneg %p40
        %s277 = smul.u32 8, %s22
        %p278 = scmp.lt.s32.totalorder %s277, 15
        %s279 = scalar_select %p278, %s277, 15
        %s280 = smul.addr %s279, 8
        %s281 = scalar_lea.vmem %s1, %s280
        %p282 = pneg %p69
        %p283 = pneg %p66
        %p284 = scmp.lt.s32.totalorder %s22, 1
        %s285 = scalar_select %p284, %s22, 1
        %s286 = smul.addr %s285, 8
        %s287 = scalar_lea.vmem %s2, %s286
        %p288 = pneg %p95
        %p289 = pneg %p92
        %p290 = pneg %p116
        %p291 = pneg %p113
        %p292 = pneg %p137
        %p293 = pneg %p134
        %p294 = pneg %p158
        %p295 = pneg %p155
        %p296 = pneg %p184
        %p297 = pneg %p181
        %s298 = sand.u32 %s171, 1
        %s299 = scalar_lea.sflag [#allocation3], %s298
        %s300 = sand.u32 %s171, 1
        %s301 = smul.addr %s300, 8
        %s302 = scalar_lea.vmem [#allocation2], %s301
        %p303 = pneg %p210
        %p304 = pneg %p207
        %p305 = scmp.lt.s32.totalorder %s22, 1
        %s306 = scalar_select %p305, %s22, 1
        %s307 = smul.addr %s306, 8
        %s308 = scalar_lea.vmem %s7, %s307
        %s309 = smul.u32 8, %s22
        %p310 = scmp.lt.s32.totalorder %s309, 15
        %s311 = scalar_select %p310, %s309, 15
        %s312 = smul.addr %s311, 8
        %s313 = scalar_lea.vmem %s0, %s312
        %s314 = smul.u32 8, %s22
        %s315 = smul.u32 8, %s22
        %p316 = scmp.lt.s32.totalorder %s315, 15
        %s317 = scalar_select %p316, %s315, 15
        %s318 = smul.addr %s317, 8
        %s319 = scalar_lea.vmem %s1, %s318
        %s320 = smul.u32 8, %s22
        %p321 = scmp.lt.s32.totalorder %s22, 1
        %s322 = scalar_select %p321, %s22, 1
        %s323 = smul.addr %s322, 8
        %s324 = scalar_lea.vmem %s2, %s323
        %p325 = scmp.lt.s32.totalorder %s22, 1
        %s326 = scalar_select %p325, %s22, 1
        %s327 = smul.addr %s326, 8
        %s328 = scalar_lea.vmem %s7, %s327
        %v329 = vld [vmem:[%s313] sm:$0xff]
        %v330 = vld [vmem:[%s313 + $0x8] sm:$0xff]
        %v331 = vld [vmem:[%s313 + $0x10] sm:$0xff]
        %v332 = vld [vmem:[%s313 + $0x18] sm:$0xff]
        %v333 = vld [vmem:[%s313 + $0x20] sm:$0xff]
        %v334 = vld [vmem:[%s313 + $0x28] sm:$0xff]
        %v335 = vld [vmem:[%s313 + $0x30] sm:$0xff]
        %v336 = vld [vmem:[%s313 + $0x38] sm:$0xff]
        %v337 = vld [vmem:[%s3] sm:$0xff]
        %v338 = vld [vmem:[%s3 + $0x8] sm:$0xff]
        %v339 = vld [vmem:[%s3 + $0x10] sm:$0xff]
        %v340 = vld [vmem:[%s3 + $0x18] sm:$0xff]
        %v341 = vld [vmem:[%s3 + $0x20] sm:$0xff]
        %v342 = vld [vmem:[%s3 + $0x28] sm:$0xff]
        %v343 = vld [vmem:[%s3 + $0x30] sm:$0xff]
        %v344 = vld [vmem:[%s3 + $0x38] sm:$0xff]
        %v345 = vld [vmem:[%s4] sm:$0x1]
        %v347 = vlaneseq
        %v348 = vshrl.u32 %v347, 7
        %v349 = vsub.s32 0, %v348
        %v350 = vrot.slane %v345, %v349
        %vm352 = vcmask 523264
        %v354 = vsel %vm352, %v329, 0
        %v357 = vsel %vm352, %v330, 0
        %v360 = vsel %vm352, %v331, 0
        %v363 = vsel %vm352, %v332, 0
        %v366 = vsel %vm352, %v333, 0
        %v369 = vsel %vm352, %v334, 0
        %v372 = vsel %vm352, %v335, 0
        %v375 = vsel %vm352, %v336, 0
        %377 = vmatprep.subr.mxu0 0.0
        %378 = vmatpush1.msra.mxu0 %v337
        %379 = vmatprep.subr.mxu0 0.0
        %380 = vmatpush1.msra.mxu0 %v338
        %381 = vmatprep.subr.mxu0 0.0
        %382 = vmatpush1.msra.mxu0 %v339
        %383 = vmatprep.subr.mxu0 0.0
        %384 = vmatpush1.msra.mxu0 %v340
        %385 = vmatprep.subr.mxu0 0.0
        %386 = vmatpush1.msra.mxu0 %v341
        %387 = vmatprep.subr.mxu0 0.0
        %388 = vmatpush1.msra.mxu0 %v342
        %389 = vmatprep.subr.mxu0 0.0
        %390 = vmatpush1.msra.mxu0 %v343
        %391 = vmatprep.subr.mxu0 0.0
        %392 = vmatpush1.msra.mxu0 %v344
        %393 = vmatprep.subr.mxu0 0.0
        %394 = vmatpush1.msra.mxu0 0.0
        %395 = vmatprep.subr.mxu0 0.0
        %396 = vmatpush1.msra.mxu0 0.0
        %397 = vmatprep.subr.mxu0 0.0
        %398 = vmatpush1.msra.mxu0 0.0
        %399 = vmatprep.subr.mxu0 0.0
        %400 = vmatpush1.msra.mxu0 0.0
        %401 = vmatprep.subr.mxu0 0.0
        %402 = vmatpush1.msra.mxu0 0.0
        %403 = vmatprep.subr.mxu0 0.0
        %404 = vmatpush1.msra.mxu0 0.0
        %405 = vmatprep.subr.mxu0 0.0
        %406 = vmatpush1.msra.mxu0 0.0
        %407 = vmatprep.subr.mxu0 0.0
        %408 = vmatpush1.msra.mxu0 0.0
        %409 = vmatprep.subr.mxu0 0.0
        %410 = vmatpush1.msra.mxu0 0.0
        %411 = vmatprep.subr.mxu0 0.0
        %412 = vmatpush1.msra.mxu0 0.0
        %413 = vmatprep.subr.mxu0 0.0
        %414 = vmatpush1.msra.mxu0 0.0
        %415 = vmatprep.subr.mxu0 0.0
        %416 = vmatpush1.msra.mxu0 0.0
        %417 = vmatprep.subr.mxu0 0.0
        %418 = vmatpush1.msra.mxu0 0.0
        %419 = vmatprep.subr.mxu0 0.0
        %420 = vmatpush1.msra.mxu0 0.0
        %421 = vmatprep.subr.mxu0 0.0
        %422 = vmatpush1.msra.mxu0 0.0
        %423 = vmatprep.subr.mxu0 0.0
        %424 = vmatpush1.msra.mxu0 0.0
        %425 = vmatprep.subr.mxu0 0.0
        %426 = vmatpush1.msra.mxu0 0.0
        %427 = vmatprep.subr.mxu0 0.0
        %428 = vmatpush1.msra.mxu0 0.0
        %429 = vmatprep.subr.mxu0 0.0
        %430 = vmatpush1.msra.mxu0 0.0
        %431 = vmatprep.subr.mxu0 0.0
        %432 = vmatpush1.msra.mxu0 0.0
        %433 = vmatprep.subr.mxu0 0.0
        %434 = vmatpush1.msra.mxu0 0.0
        %435 = vmatprep.subr.mxu0 0.0
        %436 = vmatpush1.msra.mxu0 0.0
        %437 = vmatprep.subr.mxu0 0.0
        %438 = vmatpush1.msra.mxu0 0.0
        %439 = vmatprep.subr.mxu0 0.0
        %440 = vmatpush1.msra.mxu0 0.0
        %441 = vmatprep.mubr.f32.mxu0 0.0
        %442 = vmatmul.mubr.f32.gmra.mrb[0].mxu0 %v354
        %v443 = vpop.f32.mrb[0].mxu0
        %v444 = vadd.f32 %v350, %v443
        %v445 = vpop.f32.mrb[0].mxu0
        %446 = vmatprep.mubr.f32.mxu0 0.0
        %447 = vmatmul.mubr.f32.gmra.mrb[0].mxu0 %v357
        %v448 = vpop.f32.mrb[0].mxu0
        %v449 = vadd.f32 %v350, %v448
        %v450 = vpop.f32.mrb[0].mxu0
        %451 = vmatprep.mubr.f32.mxu0 0.0
        %452 = vmatmul.mubr.f32.gmra.mrb[0].mxu0 %v360
        %v453 = vpop.f32.mrb[0].mxu0
        %v454 = vadd.f32 %v350, %v453
        %v455 = vpop.f32.mrb[0].mxu0
        %456 = vmatprep.mubr.f32.mxu0 0.0
        %457 = vmatmul.mubr.f32.gmra.mrb[0].mxu0 %v363
        %v458 = vpop.f32.mrb[0].mxu0
        %v459 = vadd.f32 %v350, %v458
        %v460 = vpop.f32.mrb[0].mxu0
        %461 = vmatprep.mubr.f32.mxu0 0.0
        %462 = vmatmul.mubr.f32.gmra.mrb[0].mxu0 %v366
        %v463 = vpop.f32.mrb[0].mxu0
        %v464 = vadd.f32 %v350, %v463
        %v465 = vpop.f32.mrb[0].mxu0
        %466 = vmatprep.mubr.f32.mxu0 0.0
        %467 = vmatmul.mubr.f32.gmra.mrb[0].mxu0 %v369
        %v468 = vpop.f32.mrb[0].mxu0
        %v469 = vadd.f32 %v350, %v468
        %v470 = vpop.f32.mrb[0].mxu0
        %471 = vmatprep.mubr.f32.mxu0 0.0
        %472 = vmatmul.mubr.f32.gmra.mrb[0].mxu0 %v372
        %v473 = vpop.f32.mrb[0].mxu0
        %v474 = vadd.f32 %v350, %v473
        %v475 = vpop.f32.mrb[0].mxu0
        %476 = vmatprep.mubr.f32.mxu0 0.0
        %477 = vmatmul.mubr.f32.gmra.mrb[0].mxu0 %v375
        %v478 = vpop.f32.mrb[0].mxu0
        %v479 = vadd.f32 %v350, %v478
        %v480 = vpop.f32.mrb[0].mxu0
        %481 = vdwg.mxu0
        %v482 = vtanh.pop %v444
        %v483 = vtanh.pop %v449
        %v484 = vtanh.pop %v454
        %v485 = vtanh.pop %v459
        %v486 = vtanh.pop %v464
        %v487 = vtanh.pop %v469
        %v488 = vtanh.pop %v474
        %v489 = vtanh.pop %v479
        %vm490 = vcmp.gt.f32.partialorder %v444, 0.0
        %vm491 = vcmp.gt.f32.partialorder %v449, 0.0
        %vm492 = vcmp.gt.f32.partialorder %v454, 0.0
        %vm493 = vcmp.gt.f32.partialorder %v459, 0.0
        %vm494 = vcmp.gt.f32.partialorder %v464, 0.0
        %vm495 = vcmp.gt.f32.partialorder %v469, 0.0
        %vm496 = vcmp.gt.f32.partialorder %v474, 0.0
        %vm497 = vcmp.gt.f32.partialorder %v479, 0.0
        %v498 = vmul.f32 %v444, 0.01
        %v499 = vmul.f32 %v449, 0.01
        %v500 = vmul.f32 %v454, 0.01
        %v501 = vmul.f32 %v459, 0.01
        %v502 = vmul.f32 %v464, 0.01
        %v503 = vmul.f32 %v469, 0.01
        %v504 = vmul.f32 %v474, 0.01
        %v505 = vmul.f32 %v479, 0.01
        %v506 = vsel %vm490, %v444, %v498
        %v507 = vsel %vm491, %v449, %v499
        %v508 = vsel %vm492, %v454, %v500
        %v509 = vsel %vm493, %v459, %v501
        %v510 = vsel %vm494, %v464, %v502
        %v511 = vsel %vm495, %v469, %v503
        %v512 = vsel %vm496, %v474, %v504
        %v513 = vsel %vm497, %v479, %v505
        %522 = vrot.lane.b32.xlu0 %v506, 96
        %v523 = vpop.permute.xlu0 %522
        %524 = vrot.lane.b32.xlu0 %v507, 96
        %v525 = vpop.permute.xlu0 %524
        %526 = vrot.lane.b32.xlu0 %v508, 96
        %v527 = vpop.permute.xlu0 %526
        %528 = vrot.lane.b32.xlu0 %v509, 96
        %v529 = vpop.permute.xlu0 %528
        %530 = vrot.lane.b32.xlu0 %v510, 96
        %v531 = vpop.permute.xlu0 %530
        %532 = vrot.lane.b32.xlu0 %v511, 96
        %v533 = vpop.permute.xlu0 %532
        %534 = vrot.lane.b32.xlu0 %v512, 96
        %v535 = vpop.permute.xlu0 %534
        %536 = vrot.lane.b32.xlu0 %v513, 96
        %v537 = vpop.permute.xlu0 %536
        %v546 = vmul.f32 %v482, %v523
        %v547 = vmul.f32 %v483, %v525
        %v548 = vmul.f32 %v484, %v527
        %v549 = vmul.f32 %v485, %v529
        %v550 = vmul.f32 %v486, %v531
        %v551 = vmul.f32 %v487, %v533
        %v552 = vmul.f32 %v488, %v535
        %v553 = vmul.f32 %v489, %v537
        %v554 = vld [vmem:[%s5] sm:$0x1]
        %v556 = vlaneseq
        %v557 = vshrl.u32 %v556, 7
        %v558 = vsub.s32 0, %v557
        %v559 = vrot.slane %v554, %v558
        %v561 = vmul.f32 %v546, %v559
        %v562 = vmul.f32 %v547, %v559
        %v563 = vmul.f32 %v548, %v559
        %v564 = vmul.f32 %v549, %v559
        %v565 = vmul.f32 %v550, %v559
        %v566 = vmul.f32 %v551, %v559
        %v567 = vmul.f32 %v552, %v559
        %v568 = vmul.f32 %v553, %v559
        %vm569 = vcmask 261120
        %v570 = vsel %vm569, %v561, 0.0
        %571 = vadd.xlane.f32.xlu0 %v570
        %v572 = vpop.xlane.xlu0 %571
        %v573 = vsel %vm569, %v562, 0.0
        %574 = vadd.xlane.f32.xlu0 %v573
        %v575 = vpop.xlane.xlu0 %574
        %v576 = vsel %vm569, %v563, 0.0
        %577 = vadd.xlane.f32.xlu0 %v576
        %v578 = vpop.xlane.xlu0 %577
        %v579 = vsel %vm569, %v564, 0.0
        %580 = vadd.xlane.f32.xlu0 %v579
        %v581 = vpop.xlane.xlu0 %580
        %v582 = vsel %vm569, %v565, 0.0
        %583 = vadd.xlane.f32.xlu0 %v582
        %v584 = vpop.xlane.xlu0 %583
        %v585 = vsel %vm569, %v566, 0.0
        %586 = vadd.xlane.f32.xlu0 %v585
        %v587 = vpop.xlane.xlu0 %586
        %v588 = vsel %vm569, %v567, 0.0
        %589 = vadd.xlane.f32.xlu0 %v588
        %v590 = vpop.xlane.xlu0 %589
        %v591 = vsel %vm569, %v568, 0.0
        %592 = vadd.xlane.f32.xlu0 %v591
        %v593 = vpop.xlane.xlu0 %592
        %v594 = vmul.f32 %v546, %v546
        %v595 = vmul.f32 %v547, %v547
        %v596 = vmul.f32 %v548, %v548
        %v597 = vmul.f32 %v549, %v549
        %v598 = vmul.f32 %v550, %v550
        %v599 = vmul.f32 %v551, %v551
        %v600 = vmul.f32 %v552, %v552
        %v601 = vmul.f32 %v553, %v553
        %v602 = vsel %vm569, %v594, 0.0
        %603 = vadd.xlane.f32.xlu0 %v602
        %v604 = vpop.xlane.xlu0 %603
        %v605 = vsel %vm569, %v595, 0.0
        %606 = vadd.xlane.f32.xlu0 %v605
        %v607 = vpop.xlane.xlu0 %606
        %v608 = vsel %vm569, %v596, 0.0
        %609 = vadd.xlane.f32.xlu0 %v608
        %v610 = vpop.xlane.xlu0 %609
        %v611 = vsel %vm569, %v597, 0.0
        %612 = vadd.xlane.f32.xlu0 %v611
        %v613 = vpop.xlane.xlu0 %612
        %v614 = vsel %vm569, %v598, 0.0
        %615 = vadd.xlane.f32.xlu0 %v614
        %v616 = vpop.xlane.xlu0 %615
        %v617 = vsel %vm569, %v599, 0.0
        %618 = vadd.xlane.f32.xlu0 %v617
        %v619 = vpop.xlane.xlu0 %618
        %v620 = vsel %vm569, %v600, 0.0
        %621 = vadd.xlane.f32.xlu0 %v620
        %v622 = vpop.xlane.xlu0 %621
        %v623 = vsel %vm569, %v601, 0.0
        %624 = vadd.xlane.f32.xlu0 %v623
        %v625 = vpop.xlane.xlu0 %624
        %v626 = vrsqrt.pop %v604
        %v627 = vmul.f32 %v604, %v626
        %vm628 = vcmp.eq.f32.partialorder %v604, inf
        %v629 = vsel %vm628, %v604, %v627
        %vm630 = vcmp.eq.f32.partialorder %v604, 0.0
        %v631 = vand.u32 %v604, 2147483648
        %v632 = vsel %vm630, %v631, %v629
        %v633 = vrsqrt.pop %v607
        %v634 = vmul.f32 %v607, %v633
        %vm635 = vcmp.eq.f32.partialorder %v607, inf
        %v636 = vsel %vm635, %v607, %v634
        %vm637 = vcmp.eq.f32.partialorder %v607, 0.0
        %v638 = vand.u32 %v607, 2147483648
        %v639 = vsel %vm637, %v638, %v636
        %v640 = vrsqrt.pop %v610
        %v641 = vmul.f32 %v610, %v640
        %vm642 = vcmp.eq.f32.partialorder %v610, inf
        %v643 = vsel %vm642, %v610, %v641
        %vm644 = vcmp.eq.f32.partialorder %v610, 0.0
        %v645 = vand.u32 %v610, 2147483648
        %v646 = vsel %vm644, %v645, %v643
        %v647 = vrsqrt.pop %v613
        %v648 = vmul.f32 %v613, %v647
        %vm649 = vcmp.eq.f32.partialorder %v613, inf
        %v650 = vsel %vm649, %v613, %v648
        %vm651 = vcmp.eq.f32.partialorder %v613, 0.0
        %v652 = vand.u32 %v613, 2147483648
        %v653 = vsel %vm651, %v652, %v650
        %v654 = vrsqrt.pop %v616
        %v655 = vmul.f32 %v616, %v654
        %vm656 = vcmp.eq.f32.partialorder %v616, inf
        %v657 = vsel %vm656, %v616, %v655
        %vm658 = vcmp.eq.f32.partialorder %v616, 0.0
        %v659 = vand.u32 %v616, 2147483648
        %v660 = vsel %vm658, %v659, %v657
        %v661 = vrsqrt.pop %v619
        %v662 = vmul.f32 %v619, %v661
        %vm663 = vcmp.eq.f32.partialorder %v619, inf
        %v664 = vsel %vm663, %v619, %v662
        %vm665 = vcmp.eq.f32.partialorder %v619, 0.0
        %v666 = vand.u32 %v619, 2147483648
        %v667 = vsel %vm665, %v666, %v664
        %v668 = vrsqrt.pop %v622
        %v669 = vmul.f32 %v622, %v668
        %vm670 = vcmp.eq.f32.partialorder %v622, inf
        %v671 = vsel %vm670, %v622, %v669
        %vm672 = vcmp.eq.f32.partialorder %v622, 0.0
        %v673 = vand.u32 %v622, 2147483648
        %v674 = vsel %vm672, %v673, %v671
        %v675 = vrsqrt.pop %v625
        %v676 = vmul.f32 %v625, %v675
        %vm677 = vcmp.eq.f32.partialorder %v625, inf
        %v678 = vsel %vm677, %v625, %v676
        %vm679 = vcmp.eq.f32.partialorder %v625, 0.0
        %v680 = vand.u32 %v625, 2147483648
        %v681 = vsel %vm679, %v680, %v678
        %v682 = vmax.f32 %v632, 1e-12
        %v683 = vmax.f32 %v639, 1e-12
        %v684 = vmax.f32 %v646, 1e-12
        %v685 = vmax.f32 %v653, 1e-12
        %v686 = vmax.f32 %v660, 1e-12
        %v687 = vmax.f32 %v667, 1e-12
        %v688 = vmax.f32 %v674, 1e-12
        %v689 = vmax.f32 %v681, 1e-12
        %v690 = vrcp.pop %v682
        %v691 = vmul.f32 %v572, %v690
        %v692 = vrcp.pop %v683
        %v693 = vmul.f32 %v575, %v692
        %v694 = vrcp.pop %v684
        %v695 = vmul.f32 %v578, %v694
        %v696 = vrcp.pop %v685
        %v697 = vmul.f32 %v581, %v696
        %v698 = vrcp.pop %v686
        %v699 = vmul.f32 %v584, %v698
        %v700 = vrcp.pop %v687
        %v701 = vmul.f32 %v587, %v700
        %v702 = vrcp.pop %v688
        %v703 = vmul.f32 %v590, %v702
        %v704 = vrcp.pop %v689
        %v705 = vmul.f32 %v593, %v704
        %v714 = vlaneseq
        %v715 = vand.u32 %v714, 127
        %v716 = vlaneseq
        %v717 = vshrl.u32 %v716, 7
        %v718 = vsub.s32 %v715, %v717
        %v719 = vrot.slane %v691, %v718
        %v720 = vlaneseq
        %v721 = vshrl.u32 %v720, 7
        %v722 = vsub.s32 %v715, %v721
        %v723 = vrot.slane %v693, %v722
        %v724 = vlaneseq
        %v725 = vshrl.u32 %v724, 7
        %v726 = vsub.s32 %v715, %v725
        %v727 = vrot.slane %v695, %v726
        %v728 = vlaneseq
        %v729 = vshrl.u32 %v728, 7
        %v730 = vsub.s32 %v715, %v729
        %v731 = vrot.slane %v697, %v730
        %v732 = vlaneseq
        %v733 = vshrl.u32 %v732, 7
        %v734 = vsub.s32 %v715, %v733
        %v735 = vrot.slane %v699, %v734
        %v736 = vlaneseq
        %v737 = vshrl.u32 %v736, 7
        %v738 = vsub.s32 %v715, %v737
        %v739 = vrot.slane %v701, %v738
        %v740 = vlaneseq
        %v741 = vshrl.u32 %v740, 7
        %v742 = vsub.s32 %v715, %v741
        %v743 = vrot.slane %v703, %v742
        %v744 = vlaneseq
        %v745 = vshrl.u32 %v744, 7
        %v746 = vsub.s32 %v715, %v745
        %v747 = vrot.slane %v705, %v746
        %vm748 = vcmask 1041409
        %v749 = vsel %vm748, %v723, %v719
        %vm750 = vcmask 1042434
        %v751 = vsel %vm750, %v727, %v749
        %vm752 = vcmask 1043459
        %v753 = vsel %vm752, %v731, %v751
        %vm754 = vcmask 1044484
        %v755 = vsel %vm754, %v735, %v753
        %vm756 = vcmask 1045509
        %v757 = vsel %vm756, %v739, %v755
        %vm758 = vcmask 1046534
        %v759 = vsel %vm758, %v743, %v757
        %vm760 = vcmask 1047559
        %v761 = vsel %vm760, %v747, %v759
        %vm763 = vcmask 64512
        %v764 = vsel %vm763, %v761, -inf
        %765 = vmax.xlane.f32.xlu0 %v764
        %v766 = vpop.xlane.xlu0 %765
        %v768 = vlaneseq
        %v769 = vshrl.u32 %v768, 7
        %v770 = vsub.s32 0, %v769
        %v771 = vrot.slane %v766, %v770
        %v772 = vlaneseq
        %v773 = vshrl.u32 %v772, 7
        %v774 = vsub.s32 1, %v773
        %v775 = vrot.slane %v766, %v774
        %v776 = vlaneseq
        %v777 = vshrl.u32 %v776, 7
        %v778 = vsub.s32 2, %v777
        %v779 = vrot.slane %v766, %v778
        %v780 = vlaneseq
        %v781 = vshrl.u32 %v780, 7
        %v782 = vsub.s32 3, %v781
        %v783 = vrot.slane %v766, %v782
        %v784 = vlaneseq
        %v785 = vshrl.u32 %v784, 7
        %v786 = vsub.s32 4, %v785
        %v787 = vrot.slane %v766, %v786
        %v788 = vlaneseq
        %v789 = vshrl.u32 %v788, 7
        %v790 = vsub.s32 5, %v789
        %v791 = vrot.slane %v766, %v790
        %v792 = vlaneseq
        %v793 = vshrl.u32 %v792, 7
        %v794 = vsub.s32 6, %v793
        %v795 = vrot.slane %v766, %v794
        %v796 = vlaneseq
        %v797 = vshrl.u32 %v796, 7
        %v798 = vsub.s32 7, %v797
        %v799 = vrot.slane %v766, %v798
        %v808 = vsub.f32 %v691, %v771
        %v809 = vsub.f32 %v693, %v775
        %v810 = vsub.f32 %v695, %v779
        %v811 = vsub.f32 %v697, %v783
        %v812 = vsub.f32 %v699, %v787
        %v813 = vsub.f32 %v701, %v791
        %v814 = vsub.f32 %v703, %v795
        %v815 = vsub.f32 %v705, %v799
        %v816 = vmul.f32 %v808, 1.442695
        %v817 = vpow.pop %v816
        %v818 = vmul.f32 %v809, 1.442695
        %v819 = vpow.pop %v818
        %v820 = vmul.f32 %v810, 1.442695
        %v821 = vpow.pop %v820
        %v822 = vmul.f32 %v811, 1.442695
        %v823 = vpow.pop %v822
        %v824 = vmul.f32 %v812, 1.442695
        %v825 = vpow.pop %v824
        %v826 = vmul.f32 %v813, 1.442695
        %v827 = vpow.pop %v826
        %v828 = vmul.f32 %v814, 1.442695
        %v829 = vpow.pop %v828
        %v830 = vmul.f32 %v815, 1.442695
        %v831 = vpow.pop %v830
        %840 = vset.pattern.permute.xlu0 0
        %841 = vperm.xlu0 %840, %v817
        %v842 = vpop.permute.xlu0 %841
        %843 = vset.pattern.permute.xlu0 0
        %844 = vperm.xlu0 %843, %v819
        %v845 = vpop.permute.xlu0 %844
        %846 = vset.pattern.permute.xlu0 0
        %847 = vperm.xlu0 %846, %v821
        %v848 = vpop.permute.xlu0 %847
        %849 = vset.pattern.permute.xlu0 0
        %850 = vperm.xlu0 %849, %v823
        %v851 = vpop.permute.xlu0 %850
        %852 = vset.pattern.permute.xlu0 0
        %853 = vperm.xlu0 %852, %v825
        %v854 = vpop.permute.xlu0 %853
        %855 = vset.pattern.permute.xlu0 0
        %856 = vperm.xlu0 %855, %v827
        %v857 = vpop.permute.xlu0 %856
        %858 = vset.pattern.permute.xlu0 0
        %859 = vperm.xlu0 %858, %v829
        %v860 = vpop.permute.xlu0 %859
        %861 = vset.pattern.permute.xlu0 0
        %862 = vperm.xlu0 %861, %v831
        %v863 = vpop.permute.xlu0 %862
        %v864 = vlaneseq
        %v865 = vshrl.u32 %v864, 7
        %v866 = vsub.s32 %v715, %v865
        %v867 = vrot.slane %v842, %v866
        %v868 = vlaneseq
        %v869 = vshrl.u32 %v868, 7
        %v870 = vsub.s32 %v715, %v869
        %v871 = vrot.slane %v845, %v870
        %v872 = vlaneseq
        %v873 = vshrl.u32 %v872, 7
        %v874 = vsub.s32 %v715, %v873
        %v875 = vrot.slane %v848, %v874
        %v876 = vlaneseq
        %v877 = vshrl.u32 %v876, 7
        %v878 = vsub.s32 %v715, %v877
        %v879 = vrot.slane %v851, %v878
        %v880 = vlaneseq
        %v881 = vshrl.u32 %v880, 7
        %v882 = vsub.s32 %v715, %v881
        %v883 = vrot.slane %v854, %v882
        %v884 = vlaneseq
        %v885 = vshrl.u32 %v884, 7
        %v886 = vsub.s32 %v715, %v885
        %v887 = vrot.slane %v857, %v886
        %v888 = vlaneseq
        %v889 = vshrl.u32 %v888, 7
        %v890 = vsub.s32 %v715, %v889
        %v891 = vrot.slane %v860, %v890
        %v892 = vlaneseq
        %v893 = vshrl.u32 %v892, 7
        %v894 = vsub.s32 %v715, %v893
        %v895 = vrot.slane %v863, %v894
        %v896 = vsel %vm748, %v871, %v867
        %v897 = vsel %vm750, %v875, %v896
        %v898 = vsel %vm752, %v879, %v897
        %v899 = vsel %vm754, %v883, %v898
        %v900 = vsel %vm756, %v887, %v899
        %v901 = vsel %vm758, %v891, %v900
        %v902 = vsel %vm760, %v895, %v901
        %v904 = vsel %vm763, %v902, 0.0
        %905 = vadd.xlane.f32.xlu0 %v904
        %v906 = vpop.xlane.xlu0 %905
        %v908 = vlaneseq
        %v909 = vshrl.u32 %v908, 7
        %v910 = vsub.s32 0, %v909
        %v911 = vrot.slane %v906, %v910
        %v912 = vlaneseq
        %v913 = vshrl.u32 %v912, 7
        %v914 = vsub.s32 1, %v913
        %v915 = vrot.slane %v906, %v914
        %v916 = vlaneseq
        %v917 = vshrl.u32 %v916, 7
        %v918 = vsub.s32 2, %v917
        %v919 = vrot.slane %v906, %v918
        %v920 = vlaneseq
        %v921 = vshrl.u32 %v920, 7
        %v922 = vsub.s32 3, %v921
        %v923 = vrot.slane %v906, %v922
        %v924 = vlaneseq
        %v925 = vshrl.u32 %v924, 7
        %v926 = vsub.s32 4, %v925
        %v927 = vrot.slane %v906, %v926
        %v928 = vlaneseq
        %v929 = vshrl.u32 %v928, 7
        %v930 = vsub.s32 5, %v929
        %v931 = vrot.slane %v906, %v930
        %v932 = vlaneseq
        %v933 = vshrl.u32 %v932, 7
        %v934 = vsub.s32 6, %v933
        %v935 = vrot.slane %v906, %v934
        %v936 = vlaneseq
        %v937 = vshrl.u32 %v936, 7
        %v938 = vsub.s32 7, %v937
        %v939 = vrot.slane %v906, %v938
        %v948 = vrcp.pop %v911
        %v949 = vmul.f32 %v817, %v948
        %v950 = vrcp.pop %v915
        %v951 = vmul.f32 %v819, %v950
        %v952 = vrcp.pop %v919
        %v953 = vmul.f32 %v821, %v952
        %v954 = vrcp.pop %v923
        %v955 = vmul.f32 %v823, %v954
        %v956 = vrcp.pop %v927
        %v957 = vmul.f32 %v825, %v956
        %v958 = vrcp.pop %v931
        %v959 = vmul.f32 %v827, %v958
        %v960 = vrcp.pop %v935
        %v961 = vmul.f32 %v829, %v960
        %v962 = vrcp.pop %v939
        %v963 = vmul.f32 %v831, %v962
        %v964 = vld [vmem:[%s324] sm:$0xff]
        %v966 = vlaneseq
        %v967 = vshrl.u32 %v966, 7
        %v968 = vsub.s32 0, %v967
        %v969 = vrot.slane %v964, %v968
        %971 = vbcast.lane.b32.xlu0 %v969, 256
        %v972 = vpop.permute.xlu0 %971
        %v973 = vlaneseq
        %v974 = vshrl.u32 %v973, 7
        %v975 = vsub.s32 1, %v974
        %v976 = vrot.slane %v964, %v975
        %978 = vbcast.lane.b32.xlu0 %v976, 256
        %v979 = vpop.permute.xlu0 %978
        %v980 = vlaneseq
        %v981 = vshrl.u32 %v980, 7
        %v982 = vsub.s32 2, %v981
        %v983 = vrot.slane %v964, %v982
        %985 = vbcast.lane.b32.xlu0 %v983, 256
        %v986 = vpop.permute.xlu0 %985
        %v987 = vlaneseq
        %v988 = vshrl.u32 %v987, 7
        %v989 = vsub.s32 3, %v988
        %v990 = vrot.slane %v964, %v989
        %992 = vbcast.lane.b32.xlu0 %v990, 256
        %v993 = vpop.permute.xlu0 %992
        %v994 = vlaneseq
        %v995 = vshrl.u32 %v994, 7
        %v996 = vsub.s32 4, %v995
        %v997 = vrot.slane %v964, %v996
        %999 = vbcast.lane.b32.xlu0 %v997, 256
        %v1000 = vpop.permute.xlu0 %999
        %v1001 = vlaneseq
        %v1002 = vshrl.u32 %v1001, 7
        %v1003 = vsub.s32 5, %v1002
        %v1004 = vrot.slane %v964, %v1003
        %1006 = vbcast.lane.b32.xlu0 %v1004, 256
        %v1007 = vpop.permute.xlu0 %1006
        %v1008 = vlaneseq
        %v1009 = vshrl.u32 %v1008, 7
        %v1010 = vsub.s32 6, %v1009
        %v1011 = vrot.slane %v964, %v1010
        %1013 = vbcast.lane.b32.xlu0 %v1011, 256
        %v1014 = vpop.permute.xlu0 %1013
        %v1015 = vlaneseq
        %v1016 = vshrl.u32 %v1015, 7
        %v1017 = vsub.s32 7, %v1016
        %v1018 = vrot.slane %v964, %v1017
        %1020 = vbcast.lane.b32.xlu0 %v1018, 256
        %v1021 = vpop.permute.xlu0 %1020
        %v1030 = vmul.f32 %v949, %v972
        %v1031 = vmul.f32 %v951, %v979
        %v1032 = vmul.f32 %v953, %v986
        %v1033 = vmul.f32 %v955, %v993
        %v1034 = vmul.f32 %v957, %v1000
        %v1035 = vmul.f32 %v959, %v1007
        %v1036 = vmul.f32 %v961, %v1014
        %v1037 = vmul.f32 %v963, %v1021
        %1046 = vset.pattern.permute.xlu0 0
        %1047 = vperm.xlu0 %1046, %v1030
        %v1048 = vpop.permute.xlu0 %1047
        %1049 = vset.pattern.permute.xlu0 0
        %1050 = vperm.xlu0 %1049, %v1031
        %v1051 = vpop.permute.xlu0 %1050
        %1052 = vset.pattern.permute.xlu0 0
        %1053 = vperm.xlu0 %1052, %v1032
        %v1054 = vpop.permute.xlu0 %1053
        %1055 = vset.pattern.permute.xlu0 0
        %1056 = vperm.xlu0 %1055, %v1033
        %v1057 = vpop.permute.xlu0 %1056
        %1058 = vset.pattern.permute.xlu0 0
        %1059 = vperm.xlu0 %1058, %v1034
        %v1060 = vpop.permute.xlu0 %1059
        %1061 = vset.pattern.permute.xlu0 0
        %1062 = vperm.xlu0 %1061, %v1035
        %v1063 = vpop.permute.xlu0 %1062
        %1064 = vset.pattern.permute.xlu0 0
        %1065 = vperm.xlu0 %1064, %v1036
        %v1066 = vpop.permute.xlu0 %1065
        %1067 = vset.pattern.permute.xlu0 0
        %1068 = vperm.xlu0 %1067, %v1037
        %v1069 = vpop.permute.xlu0 %1068
        %v1070 = vlaneseq
        %v1071 = vshrl.u32 %v1070, 7
        %v1072 = vsub.s32 %v715, %v1071
        %v1073 = vrot.slane %v1048, %v1072
        %v1074 = vlaneseq
        %v1075 = vshrl.u32 %v1074, 7
        %v1076 = vsub.s32 %v715, %v1075
        %v1077 = vrot.slane %v1051, %v1076
        %v1078 = vlaneseq
        %v1079 = vshrl.u32 %v1078, 7
        %v1080 = vsub.s32 %v715, %v1079
        %v1081 = vrot.slane %v1054, %v1080
        %v1082 = vlaneseq
        %v1083 = vshrl.u32 %v1082, 7
        %v1084 = vsub.s32 %v715, %v1083
        %v1085 = vrot.slane %v1057, %v1084
        %v1086 = vlaneseq
        %v1087 = vshrl.u32 %v1086, 7
        %v1088 = vsub.s32 %v715, %v1087
        %v1089 = vrot.slane %v1060, %v1088
        %v1090 = vlaneseq
        %v1091 = vshrl.u32 %v1090, 7
        %v1092 = vsub.s32 %v715, %v1091
        %v1093 = vrot.slane %v1063, %v1092
        %v1094 = vlaneseq
        %v1095 = vshrl.u32 %v1094, 7
        %v1096 = vsub.s32 %v715, %v1095
        %v1097 = vrot.slane %v1066, %v1096
        %v1098 = vlaneseq
        %v1099 = vshrl.u32 %v1098, 7
        %v1100 = vsub.s32 %v715, %v1099
        %v1101 = vrot.slane %v1069, %v1100
        %v1102 = vsel %vm748, %v1077, %v1073
        %v1103 = vsel %vm750, %v1081, %v1102
        %v1104 = vsel %vm752, %v1085, %v1103
        %v1105 = vsel %vm754, %v1089, %v1104
        %v1106 = vsel %vm756, %v1093, %v1105
        %v1107 = vsel %vm758, %v1097, %v1106
        %v1108 = vsel %vm760, %v1101, %v1107
        %v1110 = vsel %vm763, %v1108, 0.0
        %1111 = vadd.xlane.f32.xlu0 %v1110
        %v1112 = vpop.xlane.xlu0 %1111
        %v1114 = vlaneseq
        %v1115 = vshrl.u32 %v1114, 7
        %v1116 = vsub.s32 0, %v1115
        %v1117 = vrot.slane %v1112, %v1116
        %v1118 = vlaneseq
        %v1119 = vshrl.u32 %v1118, 7
        %v1120 = vsub.s32 1, %v1119
        %v1121 = vrot.slane %v1112, %v1120
        %v1122 = vlaneseq
        %v1123 = vshrl.u32 %v1122, 7
        %v1124 = vsub.s32 2, %v1123
        %v1125 = vrot.slane %v1112, %v1124
        %v1126 = vlaneseq
        %v1127 = vshrl.u32 %v1126, 7
        %v1128 = vsub.s32 3, %v1127
        %v1129 = vrot.slane %v1112, %v1128
        %v1130 = vlaneseq
        %v1131 = vshrl.u32 %v1130, 7
        %v1132 = vsub.s32 4, %v1131
        %v1133 = vrot.slane %v1112, %v1132
        %v1134 = vlaneseq
        %v1135 = vshrl.u32 %v1134, 7
        %v1136 = vsub.s32 5, %v1135
        %v1137 = vrot.slane %v1112, %v1136
        %v1138 = vlaneseq
        %v1139 = vshrl.u32 %v1138, 7
        %v1140 = vsub.s32 6, %v1139
        %v1141 = vrot.slane %v1112, %v1140
        %v1142 = vlaneseq
        %v1143 = vshrl.u32 %v1142, 7
        %v1144 = vsub.s32 7, %v1143
        %v1145 = vrot.slane %v1112, %v1144
        %v1154 = vrcp.pop %v1117
        %v1155 = vmul.f32 %v1030, %v1154
        %v1156 = vrcp.pop %v1121
        %v1157 = vmul.f32 %v1031, %v1156
        %v1158 = vrcp.pop %v1125
        %v1159 = vmul.f32 %v1032, %v1158
        %v1160 = vrcp.pop %v1129
        %v1161 = vmul.f32 %v1033, %v1160
        %v1162 = vrcp.pop %v1133
        %v1163 = vmul.f32 %v1034, %v1162
        %v1164 = vrcp.pop %v1137
        %v1165 = vmul.f32 %v1035, %v1164
        %v1166 = vrcp.pop %v1141
        %v1167 = vmul.f32 %v1036, %v1166
        %v1168 = vrcp.pop %v1145
        %v1169 = vmul.f32 %v1037, %v1168
        %1178 = vset.pattern.permute.xlu0 0
        %1179 = vperm.xlu0 %1178, %v1155
        %v1180 = vpop.permute.xlu0 %1179
        %1181 = vset.pattern.permute.xlu0 0
        %1182 = vperm.xlu0 %1181, %v1157
        %v1183 = vpop.permute.xlu0 %1182
        %1184 = vset.pattern.permute.xlu0 0
        %1185 = vperm.xlu0 %1184, %v1159
        %v1186 = vpop.permute.xlu0 %1185
        %1187 = vset.pattern.permute.xlu0 0
        %1188 = vperm.xlu0 %1187, %v1161
        %v1189 = vpop.permute.xlu0 %1188
        %1190 = vset.pattern.permute.xlu0 0
        %1191 = vperm.xlu0 %1190, %v1163
        %v1192 = vpop.permute.xlu0 %1191
        %1193 = vset.pattern.permute.xlu0 0
        %1194 = vperm.xlu0 %1193, %v1165
        %v1195 = vpop.permute.xlu0 %1194
        %1196 = vset.pattern.permute.xlu0 0
        %1197 = vperm.xlu0 %1196, %v1167
        %v1198 = vpop.permute.xlu0 %1197
        %1199 = vset.pattern.permute.xlu0 0
        %1200 = vperm.xlu0 %1199, %v1169
        %v1201 = vpop.permute.xlu0 %1200
        %v1202 = vlaneseq
        %v1203 = vshrl.u32 %v1202, 7
        %v1204 = vsub.s32 %v715, %v1203
        %v1205 = vrot.slane %v1180, %v1204
        %v1206 = vlaneseq
        %v1207 = vshrl.u32 %v1206, 7
        %v1208 = vsub.s32 %v715, %v1207
        %v1209 = vrot.slane %v1183, %v1208
        %v1210 = vlaneseq
        %v1211 = vshrl.u32 %v1210, 7
        %v1212 = vsub.s32 %v715, %v1211
        %v1213 = vrot.slane %v1186, %v1212
        %v1214 = vlaneseq
        %v1215 = vshrl.u32 %v1214, 7
        %v1216 = vsub.s32 %v715, %v1215
        %v1217 = vrot.slane %v1189, %v1216
        %v1218 = vlaneseq
        %v1219 = vshrl.u32 %v1218, 7
        %v1220 = vsub.s32 %v715, %v1219
        %v1221 = vrot.slane %v1192, %v1220
        %v1222 = vlaneseq
        %v1223 = vshrl.u32 %v1222, 7
        %v1224 = vsub.s32 %v715, %v1223
        %v1225 = vrot.slane %v1195, %v1224
        %v1226 = vlaneseq
        %v1227 = vshrl.u32 %v1226, 7
        %v1228 = vsub.s32 %v715, %v1227
        %v1229 = vrot.slane %v1198, %v1228
        %v1230 = vlaneseq
        %v1231 = vshrl.u32 %v1230, 7
        %v1232 = vsub.s32 %v715, %v1231
        %v1233 = vrot.slane %v1201, %v1232
        %v1234 = vsel %vm748, %v1209, %v1205
        %v1235 = vsel %vm750, %v1213, %v1234
        %v1236 = vsel %vm752, %v1217, %v1235
        %v1237 = vsel %vm754, %v1221, %v1236
        %v1238 = vsel %vm756, %v1225, %v1237
        %v1239 = vsel %vm758, %v1229, %v1238
        %v1240 = vsel %vm760, %v1233, %v1239
        %1242 = vst.msk [vmem:[%s328] sm:$0xff] %vm763, %v1240
        %v1243 = vlaneseq
        %v1244 = vshrl.u32 %v1243, 7
        %v1245 = vmul.u32 %v1244, 8
        %vm1246 = vcmp.ge.s32.totalorder %v715, %v1245
        %v1247 = vadd.s32 %v1245, 8
        %vm1248 = vcmp.lt.s32.totalorder %v715, %v1247
        %vm1249 = vmand %vm1246, %vm1248
        %v1250 = vadd.s32 %v715, 4294967288
        %v1251 = vlaneseq
        %v1252 = vshrl.u32 %v1251, 7
        %v1253 = vsub.s32 %v1250, %v1252
        %v1254 = vrot.slane %v1180, %v1253
        %v1255 = vlaneseq
        %v1256 = vshrl.u32 %v1255, 7
        %v1257 = vsub.s32 %v1250, %v1256
        %v1258 = vrot.slane %v1183, %v1257
        %v1259 = vlaneseq
        %v1260 = vshrl.u32 %v1259, 7
        %v1261 = vsub.s32 %v1250, %v1260
        %v1262 = vrot.slane %v1186, %v1261
        %v1263 = vlaneseq
        %v1264 = vshrl.u32 %v1263, 7
        %v1265 = vsub.s32 %v1250, %v1264
        %v1266 = vrot.slane %v1189, %v1265
        %v1267 = vlaneseq
        %v1268 = vshrl.u32 %v1267, 7
        %v1269 = vsub.s32 %v1250, %v1268
        %v1270 = vrot.slane %v1192, %v1269
        %v1271 = vlaneseq
        %v1272 = vshrl.u32 %v1271, 7
        %v1273 = vsub.s32 %v1250, %v1272
        %v1274 = vrot.slane %v1195, %v1273
        %v1275 = vlaneseq
        %v1276 = vshrl.u32 %v1275, 7
        %v1277 = vsub.s32 %v1250, %v1276
        %v1278 = vrot.slane %v1198, %v1277
        %v1279 = vlaneseq
        %v1280 = vshrl.u32 %v1279, 7
        %v1281 = vsub.s32 %v1250, %v1280
        %v1282 = vrot.slane %v1201, %v1281
        %v1283 = vsel %vm748, %v1258, %v1254
        %v1284 = vsel %vm750, %v1262, %v1283
        %v1285 = vsel %vm752, %v1266, %v1284
        %v1286 = vsel %vm754, %v1270, %v1285
        %v1287 = vsel %vm756, %v1274, %v1286
        %v1288 = vsel %vm758, %v1278, %v1287
        %v1289 = vsel %vm760, %v1282, %v1288
        %v1291 = vadd.s32 %v715, 4294967280
        %v1292 = vlaneseq
        %v1293 = vshrl.u32 %v1292, 7
        %v1294 = vsub.s32 %v1291, %v1293
        %v1295 = vrot.slane %v1180, %v1294
        %v1296 = vlaneseq
        %v1297 = vshrl.u32 %v1296, 7
        %v1298 = vsub.s32 %v1291, %v1297
        %v1299 = vrot.slane %v1183, %v1298
        %v1300 = vlaneseq
        %v1301 = vshrl.u32 %v1300, 7
        %v1302 = vsub.s32 %v1291, %v1301
        %v1303 = vrot.slane %v1186, %v1302
        %v1304 = vlaneseq
        %v1305 = vshrl.u32 %v1304, 7
        %v1306 = vsub.s32 %v1291, %v1305
        %v1307 = vrot.slane %v1189, %v1306
        %v1308 = vlaneseq
        %v1309 = vshrl.u32 %v1308, 7
        %v1310 = vsub.s32 %v1291, %v1309
        %v1311 = vrot.slane %v1192, %v1310
        %v1312 = vlaneseq
        %v1313 = vshrl.u32 %v1312, 7
        %v1314 = vsub.s32 %v1291, %v1313
        %v1315 = vrot.slane %v1195, %v1314
        %v1316 = vlaneseq
        %v1317 = vshrl.u32 %v1316, 7
        %v1318 = vsub.s32 %v1291, %v1317
        %v1319 = vrot.slane %v1198, %v1318
        %v1320 = vlaneseq
        %v1321 = vshrl.u32 %v1320, 7
        %v1322 = vsub.s32 %v1291, %v1321
        %v1323 = vrot.slane %v1201, %v1322
        %v1324 = vsel %vm748, %v1299, %v1295
        %v1325 = vsel %vm750, %v1303, %v1324
        %v1326 = vsel %vm752, %v1307, %v1325
        %v1327 = vsel %vm754, %v1311, %v1326
        %v1328 = vsel %vm756, %v1315, %v1327
        %v1329 = vsel %vm758, %v1319, %v1328
        %v1330 = vsel %vm760, %v1323, %v1329
        %v1332 = vadd.s32 %v715, 4294967272
        %v1333 = vlaneseq
        %v1334 = vshrl.u32 %v1333, 7
        %v1335 = vsub.s32 %v1332, %v1334
        %v1336 = vrot.slane %v1180, %v1335
        %v1337 = vlaneseq
        %v1338 = vshrl.u32 %v1337, 7
        %v1339 = vsub.s32 %v1332, %v1338
        %v1340 = vrot.slane %v1183, %v1339
        %v1341 = vlaneseq
        %v1342 = vshrl.u32 %v1341, 7
        %v1343 = vsub.s32 %v1332, %v1342
        %v1344 = vrot.slane %v1186, %v1343
        %v1345 = vlaneseq
        %v1346 = vshrl.u32 %v1345, 7
        %v1347 = vsub.s32 %v1332, %v1346
        %v1348 = vrot.slane %v1189, %v1347
        %v1349 = vlaneseq
        %v1350 = vshrl.u32 %v1349, 7
        %v1351 = vsub.s32 %v1332, %v1350
        %v1352 = vrot.slane %v1192, %v1351
        %v1353 = vlaneseq
        %v1354 = vshrl.u32 %v1353, 7
        %v1355 = vsub.s32 %v1332, %v1354
        %v1356 = vrot.slane %v1195, %v1355
        %v1357 = vlaneseq
        %v1358 = vshrl.u32 %v1357, 7
        %v1359 = vsub.s32 %v1332, %v1358
        %v1360 = vrot.slane %v1198, %v1359
        %v1361 = vlaneseq
        %v1362 = vshrl.u32 %v1361, 7
        %v1363 = vsub.s32 %v1332, %v1362
        %v1364 = vrot.slane %v1201, %v1363
        %v1365 = vsel %vm748, %v1340, %v1336
        %v1366 = vsel %vm750, %v1344, %v1365
        %v1367 = vsel %vm752, %v1348, %v1366
        %v1368 = vsel %vm754, %v1352, %v1367
        %v1369 = vsel %vm756, %v1356, %v1368
        %v1370 = vsel %vm758, %v1360, %v1369
        %v1371 = vsel %vm760, %v1364, %v1370
        %v1373 = vadd.s32 %v715, 4294967264
        %v1374 = vlaneseq
        %v1375 = vshrl.u32 %v1374, 7
        %v1376 = vsub.s32 %v1373, %v1375
        %v1377 = vrot.slane %v1180, %v1376
        %v1378 = vlaneseq
        %v1379 = vshrl.u32 %v1378, 7
        %v1380 = vsub.s32 %v1373, %v1379
        %v1381 = vrot.slane %v1183, %v1380
        %v1382 = vlaneseq
        %v1383 = vshrl.u32 %v1382, 7
        %v1384 = vsub.s32 %v1373, %v1383
        %v1385 = vrot.slane %v1186, %v1384
        %v1386 = vlaneseq
        %v1387 = vshrl.u32 %v1386, 7
        %v1388 = vsub.s32 %v1373, %v1387
        %v1389 = vrot.slane %v1189, %v1388
        %v1390 = vlaneseq
        %v1391 = vshrl.u32 %v1390, 7
        %v1392 = vsub.s32 %v1373, %v1391
        %v1393 = vrot.slane %v1192, %v1392
        %v1394 = vlaneseq
        %v1395 = vshrl.u32 %v1394, 7
        %v1396 = vsub.s32 %v1373, %v1395
        %v1397 = vrot.slane %v1195, %v1396
        %v1398 = vlaneseq
        %v1399 = vshrl.u32 %v1398, 7
        %v1400 = vsub.s32 %v1373, %v1399
        %v1401 = vrot.slane %v1198, %v1400
        %v1402 = vlaneseq
        %v1403 = vshrl.u32 %v1402, 7
        %v1404 = vsub.s32 %v1373, %v1403
        %v1405 = vrot.slane %v1201, %v1404
        %v1406 = vsel %vm748, %v1381, %v1377
        %v1407 = vsel %vm750, %v1385, %v1406
        %v1408 = vsel %vm752, %v1389, %v1407
        %v1409 = vsel %vm754, %v1393, %v1408
        %v1410 = vsel %vm756, %v1397, %v1409
        %v1411 = vsel %vm758, %v1401, %v1410
        %v1412 = vsel %vm760, %v1405, %v1411
        %v1414 = vadd.s32 %v715, 4294967256
        %v1415 = vlaneseq
        %v1416 = vshrl.u32 %v1415, 7
        %v1417 = vsub.s32 %v1414, %v1416
        %v1418 = vrot.slane %v1180, %v1417
        %v1419 = vlaneseq
        %v1420 = vshrl.u32 %v1419, 7
        %v1421 = vsub.s32 %v1414, %v1420
        %v1422 = vrot.slane %v1183, %v1421
        %v1423 = vlaneseq
        %v1424 = vshrl.u32 %v1423, 7
        %v1425 = vsub.s32 %v1414, %v1424
        %v1426 = vrot.slane %v1186, %v1425
        %v1427 = vlaneseq
        %v1428 = vshrl.u32 %v1427, 7
        %v1429 = vsub.s32 %v1414, %v1428
        %v1430 = vrot.slane %v1189, %v1429
        %v1431 = vlaneseq
        %v1432 = vshrl.u32 %v1431, 7
        %v1433 = vsub.s32 %v1414, %v1432
        %v1434 = vrot.slane %v1192, %v1433
        %v1435 = vlaneseq
        %v1436 = vshrl.u32 %v1435, 7
        %v1437 = vsub.s32 %v1414, %v1436
        %v1438 = vrot.slane %v1195, %v1437
        %v1439 = vlaneseq
        %v1440 = vshrl.u32 %v1439, 7
        %v1441 = vsub.s32 %v1414, %v1440
        %v1442 = vrot.slane %v1198, %v1441
        %v1443 = vlaneseq
        %v1444 = vshrl.u32 %v1443, 7
        %v1445 = vsub.s32 %v1414, %v1444
        %v1446 = vrot.slane %v1201, %v1445
        %v1447 = vsel %vm748, %v1422, %v1418
        %v1448 = vsel %vm750, %v1426, %v1447
        %v1449 = vsel %vm752, %v1430, %v1448
        %v1450 = vsel %vm754, %v1434, %v1449
        %v1451 = vsel %vm756, %v1438, %v1450
        %v1452 = vsel %vm758, %v1442, %v1451
        %v1453 = vsel %vm760, %v1446, %v1452
        %v1455 = vadd.s32 %v715, 4294967248
        %v1456 = vlaneseq
        %v1457 = vshrl.u32 %v1456, 7
        %v1458 = vsub.s32 %v1455, %v1457
        %v1459 = vrot.slane %v1180, %v1458
        %v1460 = vlaneseq
        %v1461 = vshrl.u32 %v1460, 7
        %v1462 = vsub.s32 %v1455, %v1461
        %v1463 = vrot.slane %v1183, %v1462
        %v1464 = vlaneseq
        %v1465 = vshrl.u32 %v1464, 7
        %v1466 = vsub.s32 %v1455, %v1465
        %v1467 = vrot.slane %v1186, %v1466
        %v1468 = vlaneseq
        %v1469 = vshrl.u32 %v1468, 7
        %v1470 = vsub.s32 %v1455, %v1469
        %v1471 = vrot.slane %v1189, %v1470
        %v1472 = vlaneseq
        %v1473 = vshrl.u32 %v1472, 7
        %v1474 = vsub.s32 %v1455, %v1473
        %v1475 = vrot.slane %v1192, %v1474
        %v1476 = vlaneseq
        %v1477 = vshrl.u32 %v1476, 7
        %v1478 = vsub.s32 %v1455, %v1477
        %v1479 = vrot.slane %v1195, %v1478
        %v1480 = vlaneseq
        %v1481 = vshrl.u32 %v1480, 7
        %v1482 = vsub.s32 %v1455, %v1481
        %v1483 = vrot.slane %v1198, %v1482
        %v1484 = vlaneseq
        %v1485 = vshrl.u32 %v1484, 7
        %v1486 = vsub.s32 %v1455, %v1485
        %v1487 = vrot.slane %v1201, %v1486
        %v1488 = vsel %vm748, %v1463, %v1459
        %v1489 = vsel %vm750, %v1467, %v1488
        %v1490 = vsel %vm752, %v1471, %v1489
        %v1491 = vsel %vm754, %v1475, %v1490
        %v1492 = vsel %vm756, %v1479, %v1491
        %v1493 = vsel %vm758, %v1483, %v1492
        %v1494 = vsel %vm760, %v1487, %v1493
        %v1496 = vadd.s32 %v715, 4294967240
        %v1497 = vlaneseq
        %v1498 = vshrl.u32 %v1497, 7
        %v1499 = vsub.s32 %v1496, %v1498
        %v1500 = vrot.slane %v1180, %v1499
        %v1501 = vlaneseq
        %v1502 = vshrl.u32 %v1501, 7
        %v1503 = vsub.s32 %v1496, %v1502
        %v1504 = vrot.slane %v1183, %v1503
        %v1505 = vlaneseq
        %v1506 = vshrl.u32 %v1505, 7
        %v1507 = vsub.s32 %v1496, %v1506
        %v1508 = vrot.slane %v1186, %v1507
        %v1509 = vlaneseq
        %v1510 = vshrl.u32 %v1509, 7
        %v1511 = vsub.s32 %v1496, %v1510
        %v1512 = vrot.slane %v1189, %v1511
        %v1513 = vlaneseq
        %v1514 = vshrl.u32 %v1513, 7
        %v1515 = vsub.s32 %v1496, %v1514
        %v1516 = vrot.slane %v1192, %v1515
        %v1517 = vlaneseq
        %v1518 = vshrl.u32 %v1517, 7
        %v1519 = vsub.s32 %v1496, %v1518
        %v1520 = vrot.slane %v1195, %v1519
        %v1521 = vlaneseq
        %v1522 = vshrl.u32 %v1521, 7
        %v1523 = vsub.s32 %v1496, %v1522
        %v1524 = vrot.slane %v1198, %v1523
        %v1525 = vlaneseq
        %v1526 = vshrl.u32 %v1525, 7
        %v1527 = vsub.s32 %v1496, %v1526
        %v1528 = vrot.slane %v1201, %v1527
        %v1529 = vsel %vm748, %v1504, %v1500
        %v1530 = vsel %vm750, %v1508, %v1529
        %v1531 = vsel %vm752, %v1512, %v1530
        %v1532 = vsel %vm754, %v1516, %v1531
        %v1533 = vsel %vm756, %v1520, %v1532
        %v1534 = vsel %vm758, %v1524, %v1533
        %v1535 = vsel %vm760, %v1528, %v1534
        %v1537 = vsel %vm763, %v1240, %v1289
        %vm1538 = vcmask 130048
        %v1539 = vsel %vm1538, %v1537, %v1330
        %vm1540 = vcmask 195584
        %v1541 = vsel %vm1540, %v1539, %v1371
        %v1542 = vsel %vm569, %v1541, %v1412
        %vm1543 = vcmask 326656
        %v1544 = vsel %vm1543, %v1542, %v1453
        %vm1545 = vcmask 392192
        %v1546 = vsel %vm1545, %v1544, %v1494
        %vm1547 = vcmask 457728
        %v1548 = vsel %vm1547, %v1546, %v1535
        %v1549 = vsel %vm1249, %v1548, 0.0
        %v1550 = vld [vmem:[%s319] sm:$0xff]
        %v1551 = vld [vmem:[%s319 + $0x8] sm:$0xff]
        %v1552 = vld [vmem:[%s319 + $0x10] sm:$0xff]
        %v1553 = vld [vmem:[%s319 + $0x18] sm:$0xff]
        %v1554 = vld [vmem:[%s319 + $0x20] sm:$0xff]
        %v1555 = vld [vmem:[%s319 + $0x28] sm:$0xff]
        %v1556 = vld [vmem:[%s319 + $0x30] sm:$0xff]
        %v1557 = vld [vmem:[%s319 + $0x38] sm:$0xff]
        %v1559 = vsel %vm352, %v1549, 0
        %1561 = vmatprep.subr.mxu0 0.0
        %1562 = vmatpush1.msra.mxu0 %v1550
        %1563 = vmatprep.subr.mxu0 0.0
        %1564 = vmatpush1.msra.mxu0 %v1551
        %1565 = vmatprep.subr.mxu0 0.0
        %1566 = vmatpush1.msra.mxu0 %v1552
        %1567 = vmatprep.subr.mxu0 0.0
        %1568 = vmatpush1.msra.mxu0 %v1553
        %1569 = vmatprep.subr.mxu0 0.0
        %1570 = vmatpush1.msra.mxu0 %v1554
        %1571 = vmatprep.subr.mxu0 0.0
        %1572 = vmatpush1.msra.mxu0 %v1555
        %1573 = vmatprep.subr.mxu0 0.0
        %1574 = vmatpush1.msra.mxu0 %v1556
        %1575 = vmatprep.subr.mxu0 0.0
        %1576 = vmatpush1.msra.mxu0 %v1557
        %1577 = vmatprep.subr.mxu0 0.0
        %1578 = vmatpush1.msra.mxu0 0.0
        %1579 = vmatprep.subr.mxu0 0.0
        %1580 = vmatpush1.msra.mxu0 0.0
        %1581 = vmatprep.subr.mxu0 0.0
        %1582 = vmatpush1.msra.mxu0 0.0
        %1583 = vmatprep.subr.mxu0 0.0
        %1584 = vmatpush1.msra.mxu0 0.0
        %1585 = vmatprep.subr.mxu0 0.0
        %1586 = vmatpush1.msra.mxu0 0.0
        %1587 = vmatprep.subr.mxu0 0.0
        %1588 = vmatpush1.msra.mxu0 0.0
        %1589 = vmatprep.subr.mxu0 0.0
        %1590 = vmatpush1.msra.mxu0 0.0
        %1591 = vmatprep.subr.mxu0 0.0
        %1592 = vmatpush1.msra.mxu0 0.0
        %1593 = vmatprep.subr.mxu0 0.0
        %1594 = vmatpush1.msra.mxu0 0.0
        %1595 = vmatprep.subr.mxu0 0.0
        %1596 = vmatpush1.msra.mxu0 0.0
        %1597 = vmatprep.subr.mxu0 0.0
        %1598 = vmatpush1.msra.mxu0 0.0
        %1599 = vmatprep.subr.mxu0 0.0
        %1600 = vmatpush1.msra.mxu0 0.0
        %1601 = vmatprep.subr.mxu0 0.0
        %1602 = vmatpush1.msra.mxu0 0.0
        %1603 = vmatprep.subr.mxu0 0.0
        %1604 = vmatpush1.msra.mxu0 0.0
        %1605 = vmatprep.subr.mxu0 0.0
        %1606 = vmatpush1.msra.mxu0 0.0
        %1607 = vmatprep.subr.mxu0 0.0
        %1608 = vmatpush1.msra.mxu0 0.0
        %1609 = vmatprep.subr.mxu0 0.0
        %1610 = vmatpush1.msra.mxu0 0.0
        %1611 = vmatprep.subr.mxu0 0.0
        %1612 = vmatpush1.msra.mxu0 0.0
        %1613 = vmatprep.subr.mxu0 0.0
        %1614 = vmatpush1.msra.mxu0 0.0
        %1615 = vmatprep.subr.mxu0 0.0
        %1616 = vmatpush1.msra.mxu0 0.0
        %1617 = vmatprep.subr.mxu0 0.0
        %1618 = vmatpush1.msra.mxu0 0.0
        %1619 = vmatprep.subr.mxu0 0.0
        %1620 = vmatpush1.msra.mxu0 0.0
        %1621 = vmatprep.subr.mxu0 0.0
        %1622 = vmatpush1.msra.mxu0 0.0
        %1623 = vmatprep.subr.mxu0 0.0
        %1624 = vmatpush1.msra.mxu0 0.0
        %1625 = vmatprep.mubr.f32.mxu0 0.0
        %1626 = vmatmul.mubr.f32.gmra.mrb[0].mxu0 %v1559
        %v1627 = vpop.f32.mrb[0].mxu0
        %v1628 = vadd.f32 0.0, %v1627
        %v1629 = vpop.f32.mrb[0].mxu0
        %1630 = vdwg.mxu0
        %1631 = vst.msk [vmem:[%s302] sm:$0xff] %vm352, %v1628
        %s1632 = sand.u32 %s171, 1
        %s1633 = scalar_lea.sflag [#allocation3], %s1632
        %s1634 = sand.u32 %s171, 1
        %s1635 = smul.addr %s1634, 8
        %s1636 = scalar_lea.vmem [#allocation2], %s1635
        %p1637 = scmp.lt.s32.totalorder %s22, 1
        %s1638 = scalar_select %p1637, %s22, 1
        %s1639 = smul.addr %s1638, 8
        %s1640 = scalar_lea.vmem %s7, %s1639
        // Predicated region
        $region45: #{tpu_custom_call.1} parent=43 // pred_check
          %p1641 = pneg %p181
        $region46: #{tpu_custom_call.1} parent=43 // pred_check_branch
          %1643 = sbr.rel (%p1641) target = $region48
        $region47: #{tpu_custom_call.1} parent=43 // pred_region
          %s1645 = ssub.s32 128, 128
          %1646 = vsyncadd %s1633, %s1645
          %s1647 = smul.addr %s22, 128
          %s1648 = scalar_lea.hbm %s6, %s1647
          %s1650 = sshll.u32 %s1636, 4
          %s1651 = int_to_ptr.vmem [resolvable:$true] %s1650
          %1653 = dma.vmem_to_hbm [thread:$0]  %s1651, 128, %s1648, %s1633
        $region48: #{tpu_custom_call.1} parent=43 // pred_fallthru
          _
        // Predicated region
        $region49: #{tpu_custom_call.1} parent=43 // pred_check
          %p1654 = pneg %p207
        $region50: #{tpu_custom_call.1} parent=43 // pred_check_branch
          %1656 = sbr.rel (%p1654) target = $region52
        $region51: #{tpu_custom_call.1} parent=43 // pred_region
          _
        $region52: #{tpu_custom_call.1} parent=43 // pred_fallthru
          _
      $region44: #{tpu_custom_call.1} parent=5 // pred_fallthru
        _
      %p1657 = scmp.le.s32.totalorder 2, %s17
      // Predicated region
      $region53: #{tpu_custom_call.1} parent=5 // pred_check
        %p1658 = pneg %p1657
      $region54: #{tpu_custom_call.1} parent=5 // pred_check_branch
        %1660 = sbr.rel (%p1658) target = $region56
      $region55: #{tpu_custom_call.1} parent=5 // pred_region
        %s1661 = ssub.s32 %s17, 2
        // Predicated region
        $region57: #{tpu_custom_call.1} parent=55 // pred_check
          %p1662 = pneg %p187
        $region58: #{tpu_custom_call.1} parent=55 // pred_check_branch
          %1664 = sbr.rel (%p1662) target = $region60
        $region59: #{tpu_custom_call.1} parent=55 // pred_region
          %s1665 = sand.u32 %s172, 1
          %s1666 = scalar_lea.sflag [#allocation3], %s1665
          %s1667 = sand.u32 %s172, 1
          %s1668 = smul.addr %s1667, 8
          %s1669 = scalar_lea.vmem [#allocation2], %s1668
          %1670 = dma.done %s1666, 128
        $region60: #{tpu_custom_call.1} parent=55 // pred_fallthru
          _
        // Predicated region
        $region61: #{tpu_custom_call.1} parent=55 // pred_check
          %p1671 = pneg %p213
        $region62: #{tpu_custom_call.1} parent=55 // pred_check_branch
          %1673 = sbr.rel (%p1671) target = $region64
        $region63: #{tpu_custom_call.1} parent=55 // pred_region
          %p1674 = scmp.lt.s32.totalorder %s23, 1
          %s1675 = scalar_select %p1674, %s23, 1
          %s1676 = smul.addr %s1675, 8
          %s1677 = scalar_lea.vmem %s7, %s1676
        $region64: #{tpu_custom_call.1} parent=55 // pred_fallthru
          _
      $region56: #{tpu_custom_call.1} parent=5 // pred_fallthru
        _
    $region6: #{tpu_custom_call.1} parent=1 // loop_footer
      %s21 = sadd.s32 1, %s17
    $region7: #{tpu_custom_call.1} parent=1 // loop_footer_branch
      %16 = sbr.rel target = $region3
    $region8: #{tpu_custom_call.1} parent=1 // loop_exit
      _
    %1678 = vsyncpa [#allocation3], 1
    %s1679 = scalar_lea.sflag [#allocation3], 1
    %1680 = vsyncpa %s1679, 1

</llo_original>
